<compile_context>
chip_gen: v6e
topology: v6e:2x2x1
jax: 0.10.0
libtpu: 0.0.40
codegen_flags: <defaults>
</compile_context>

<pallas_src>
import jax
import jax.numpy as jnp
from jax.experimental import pallas as pl
from jax.experimental.pallas import tpu as pltpu


# ----------------------------------------------------------------------------
# Fused kernel factory: all LSTM layers + final FC in one kernel.
# Kernel-internal gate order is [i, f, o, g] (permuted from PyTorch [i,f,g,o]).
# ----------------------------------------------------------------------------
def _make_fused_kernel(T, B, H, L):
    H3 = 3 * H

    def kernel(*args):
        n_in = 3 + 3 * L + 2
        x2d_ref, h0_ref, c0_ref = args[0:3]           # (T*B,E) bf16, (L,B,H) f32 x2
        layer_refs = args[3:3 + 3 * L]                 # per layer: w_ih, w_hh, b
        w_fc_ref, b_fc_ref = args[3 + 3 * L:n_in]      # (H,Vp) bf16, (1,Vp) f32
        logits_ref, hN_ref, cN_ref = args[n_in:n_in + 3]
        gx_sc, y_sc = args[n_in + 3:]                  # VMEM scratch (f32 / bf16)

        def run_layer(l, in_2d_bf16):
            w_ih = layer_refs[3 * l][...]      # (in_dim, 4H) bf16, cols [i,f,o,g]
            w_hh = layer_refs[3 * l + 1][...]  # (H, 4H)      bf16
            b = layer_refs[3 * l + 2][...]     # (1, 4H)      f32

            # Hoisted input projection for all T timesteps: one MXU matmul.
            gx_sc[...] = (
                jnp.dot(in_2d_bf16, w_ih, preferred_element_type=jnp.float32)
                + b)

            def step(t, carry):
                h, c = carry                                    # (B, H) f32
                row = pl.multiple_of(t * B, B)
                gates = gx_sc[pl.ds(row, B), :] + jnp.dot(
                    h.astype(jnp.bfloat16), w_hh,
                    preferred_element_type=jnp.float32)         # (B, 4H) f32
                # [i | f | o] share one sigmoid pass; tanh only touches g.
                sig = jax.nn.sigmoid(gates[:, :H3])
                g_g = jnp.tanh(gates[:, H3:])
                i_g = sig[:, 0:H]
                f_g = sig[:, H:2 * H]
                o_g = sig[:, 2 * H:H3]
                c_new = f_g * c + i_g * g_g
                h_new = o_g * jnp.tanh(c_new)
                # Store once in bf16: feeds layer l+1 and the FC matmul.
                y_sc[pl.ds(row, B), :] = h_new.astype(jnp.bfloat16)
                return h_new, c_new

            h_fin, c_fin = jax.lax.fori_loop(
                0, T, step, (h0_ref[l], c0_ref[l]), unroll=min(T, 8))
            hN_ref[l] = h_fin
            cN_ref[l] = c_fin

        # Layer 0 consumes the embedded tokens; deeper layers read y_sc (bf16).
        run_layer(0, x2d_ref[...])
        for l in range(1, L):
            run_layer(l, y_sc[...])

        # Fused final FC over all T*B rows; Vp is a multiple of 128 lanes so
        # the store is unmasked / lane-dense.
        logits_ref[...] = (
            jnp.dot(y_sc[...], w_fc_ref[...],
                    preferred_element_type=jnp.float32)
            + b_fc_ref[...])

    return kernel


def fused_forward(x2d, h0s, c0s, layer_params, w_fc_t, b_fc_row):
    """x2d: (T*B, E) time-major flattened (row = t*B + b).

    Returns (logits_tb: (T*B, V) with row = t*B + b, h_n: (L,B,H), c_n: (L,B,H)).
    """
    TB, E = x2d.shape
    L, B, H = h0s.shape
    T = TB // B
    V = w_fc_t.shape[-1]
    Vp = ((V + 127) // 128) * 128          # lane-dense padded vocab

    # Zero-pad the FC weight/bias to Vp lanes (static at trace time).
    w_fc_pad = jnp.zeros((H, Vp), jnp.float32).at[:, :V].set(w_fc_t)
    b_fc_pad = jnp.zeros((1, Vp), jnp.float32).at[:, :V].set(b_fc_row)

    kernel = _make_fused_kernel(T, B, H, L)

    flat_weights = []
    for p in layer_params:
        flat_weights += [p["w_ih_t"].astype(jnp.bfloat16),
                         p["w_hh_t"].astype(jnp.bfloat16),
                         p["b"]]

    out_shape = (
        jax.ShapeDtypeStruct((T * B, Vp), jnp.float32),  # logits (time-major rows)
        jax.ShapeDtypeStruct((L, B, H), jnp.float32),    # h_n
        jax.ShapeDtypeStruct((L, B, H), jnp.float32),    # c_n
    )

    logits_pad, h_n, c_n = pl.pallas_call(
        kernel,
        out_shape=out_shape,
        scratch_shapes=[
            pltpu.VMEM((T * B, 4 * H), jnp.float32),   # hoisted input-proj gates
            pltpu.VMEM((T * B, H), jnp.bfloat16),      # inter-layer activations
        ],
    )(x2d.astype(jnp.bfloat16), h0s, c0s, *flat_weights,
      w_fc_pad.astype(jnp.bfloat16), b_fc_pad)

    return logits_pad[:, :V], h_n, c_n


# ----------------------------------------------------------------------------
# Parameters / model wrapper (plain JAX glue: embedding gather, row reorder)
# ----------------------------------------------------------------------------
def _permute_gate_rows(w, H):
    """PyTorch gate-row order [i, f, g, o] -> kernel order [i, f, o, g]."""
    return jnp.concatenate([w[:2 * H], w[3 * H:4 * H], w[2 * H:3 * H]], axis=0)


def init_params(key, vocab_size, embedding_dim, hidden_dim, num_layers):
    ks = jax.random.split(key, 3 + num_layers)
    k = 1.0 / jnp.sqrt(hidden_dim)
    H = hidden_dim

    emb = jax.random.normal(ks[0], (vocab_size, embedding_dim), jnp.float32) * 0.1
    emb = emb.at[0].set(0.0)  # padding_idx=0

    layers = []
    for l in range(num_layers):
        in_dim = embedding_dim if l == 0 else hidden_dim
        kw = jax.random.split(ks[3 + l], 4)
        # PyTorch layout: (4H, in_dim) rows ordered [i, f, g, o].
        w_ih = jax.random.uniform(kw[0], (4 * H, in_dim), jnp.float32, -k, k)
        w_hh = jax.random.uniform(kw[1], (4 * H, H), jnp.float32, -k, k)
        b_ih = jax.random.uniform(kw[2], (4 * H,), jnp.float32, -k, k)
        b_hh = jax.random.uniform(kw[3], (4 * H,), jnp.float32, -k, k)
        layers.append({
            "w_ih_t": _permute_gate_rows(w_ih, H).T,             # (in_dim, 4H)
            "w_hh_t": _permute_gate_rows(w_hh, H).T,             # (H, 4H)
            "b": _permute_gate_rows(b_ih + b_hh, H)[None, :],    # (1, 4H)
        })

    w_fc = jax.random.uniform(ks[1], (vocab_size, H), jnp.float32, -k, k)
    b_fc = jax.random.uniform(ks[2], (vocab_size,), jnp.float32, -k, k)

    return {
        "embedding": emb,
        "layers": layers,
        "w_fc_t": w_fc.T,        # (H, V)
        "b_fc": b_fc[None, :],   # (1, V)
    }


@jax.jit
def lstm_language_model(params, tokens, hidden):
    """tokens: (B, T) int32; hidden: (h0, c0) each (num_layers, B, H)."""
    h0s, c0s = hidden
    B, T = tokens.shape
    V = params["w_fc_t"].shape[-1]

    # Embedding gather + layout to time-major flattened rows (row = t*B + b).
    embed = jnp.take(params["embedding"], tokens, axis=0)       # (B, T, E)
    x2d = jnp.transpose(embed, (1, 0, 2)).reshape(T * B, -1)    # (T*B, E)

    logits_tb, h_n, c_n = fused_forward(
        x2d, h0s, c0s, params["layers"], params["w_fc_t"], params["b_fc"])

    # Reorder rows t*B + b  ->  b*T + t to match PyTorch's logits.view(-1, V)
    # with batch_first=True.
    logits = jnp.transpose(logits_tb.reshape(T, B, V), (1, 0, 2)).reshape(B * T, V)
    return logits, (h_n, c_n)


def init_hidden(num_layers, batch_size, hidden_dim):
    return (jnp.zeros((num_layers, batch_size, hidden_dim), jnp.float32),
            jnp.zeros((num_layers, batch_size, hidden_dim), jnp.float32))


if __name__ == "__main__":
    VOCAB = 64
    EMBED = 32
    HIDDEN = 32
    NUM_LAYERS = 2
    BATCH = 8
    SEQ = 8

    key = jax.random.PRNGKey(0)
    k_param, k_tok = jax.random.split(key)

    params = init_params(k_param, VOCAB, EMBED, HIDDEN, NUM_LAYERS)
    tokens = jax.random.randint(k_tok, (BATCH, SEQ), 0, VOCAB, dtype=jnp.int32)
    hidden = init_hidden(NUM_LAYERS, BATCH, HIDDEN)

    logits, (h_n, c_n) = lstm_language_model(params, tokens, hidden)
    jax.block_until_ready((logits, h_n, c_n))

    assert logits.shape == (BATCH * SEQ, VOCAB)
    assert h_n.shape == (NUM_LAYERS, BATCH, HIDDEN)
    assert c_n.shape == (NUM_LAYERS, BATCH, HIDDEN)
    assert bool(jnp.all(jnp.isfinite(logits)))
    assert bool(jnp.all(jnp.isfinite(h_n))) and bool(jnp.all(jnp.isfinite(c_n)))
    print("KERNEL_OK")
</pallas_src>

<mosaic_0001>
module attributes {stable_mosaic.version = 11 : i64} {
  func.func @kernel(%arg0: memref<64x32xbf16, #tpu.memory_space<vmem>>, %arg1: memref<2x8x32xf32, #tpu.memory_space<vmem>>, %arg2: memref<2x8x32xf32, #tpu.memory_space<vmem>>, %arg3: memref<32x128xbf16, #tpu.memory_space<vmem>>, %arg4: memref<32x128xbf16, #tpu.memory_space<vmem>>, %arg5: memref<1x128xf32, #tpu.memory_space<vmem>>, %arg6: memref<32x128xbf16, #tpu.memory_space<vmem>>, %arg7: memref<32x128xbf16, #tpu.memory_space<vmem>>, %arg8: memref<1x128xf32, #tpu.memory_space<vmem>>, %arg9: memref<32x128xbf16, #tpu.memory_space<vmem>>, %arg10: memref<1x128xf32, #tpu.memory_space<vmem>>, %arg11: memref<64x128xf32, #tpu.memory_space<vmem>>, %arg12: memref<2x8x32xf32, #tpu.memory_space<vmem>>, %arg13: memref<2x8x32xf32, #tpu.memory_space<vmem>>, %arg14: memref<64x128xf32, #tpu.memory_space<vmem>>, %arg15: memref<64x32xbf16, #tpu.memory_space<vmem>>) attributes {dimension_semantics = [], scalar_prefetch = 0 : i64, scratch_operands = 2 : i64, tpu.core_type = #tpu.core_type<tc>} {
    %c0 = arith.constant 0 : index
    %c0_0 = arith.constant 0 : index
    %0 = vector.load %arg0[%c0, %c0_0] : memref<64x32xbf16, #tpu.memory_space<vmem>>, vector<64x32xbf16>
    %c0_1 = arith.constant 0 : index
    %c0_2 = arith.constant 0 : index
    %1 = vector.load %arg3[%c0_1, %c0_2] : memref<32x128xbf16, #tpu.memory_space<vmem>>, vector<32x128xbf16>
    %c0_3 = arith.constant 0 : index
    %c0_4 = arith.constant 0 : index
    %2 = vector.load %arg4[%c0_3, %c0_4] : memref<32x128xbf16, #tpu.memory_space<vmem>>, vector<32x128xbf16>
    %c0_5 = arith.constant 0 : index
    %c0_6 = arith.constant 0 : index
    %3 = vector.load %arg5[%c0_5, %c0_6] : memref<1x128xf32, #tpu.memory_space<vmem>>, vector<1x128xf32>
    %cst = arith.constant dense<0.000000e+00> : vector<64x128xf32>
    %4 = tpu.matmul %0, %1, %cst {dimension_numbers = #tpu.dot_dimension_numbers<[1], [0], [0], [1], [0, 0, 1, 1], [], []>} : vector<64x32xbf16>, vector<32x128xbf16>, vector<64x128xf32> -> vector<64x128xf32>
    %5 = vector.broadcast %3 : vector<1x128xf32> to vector<64x128xf32>
    %6 = arith.addf %4, %5 : vector<64x128xf32>
    %c0_7 = arith.constant 0 : index
    %c0_8 = arith.constant 0 : index
    %7 = vector.load %arg14[%c0_7, %c0_8] : memref<64x128xf32, #tpu.memory_space<vmem>>, vector<64x128xf32>
    tpu.vector_store %arg14[%c0_7, %c0_8], %6 {strides = array<i32>} : memref<64x128xf32, #tpu.memory_space<vmem>>, vector<64x128xf32>,
    %c0_9 = arith.constant 0 : index
    %c0_10 = arith.constant 0 : index
    %c0_11 = arith.constant 0 : index
    %8 = vector.load %arg1[%c0_9, %c0_10, %c0_11] : memref<2x8x32xf32, #tpu.memory_space<vmem>>, vector<1x8x32xf32>
    %9 = vector.shape_cast %8 : vector<1x8x32xf32> to vector<8x32xf32>
    %c0_12 = arith.constant 0 : index
    %c0_13 = arith.constant 0 : index
    %c0_14 = arith.constant 0 : index
    %10 = vector.load %arg2[%c0_12, %c0_13, %c0_14] : memref<2x8x32xf32, #tpu.memory_space<vmem>>, vector<1x8x32xf32>
    %11 = vector.shape_cast %10 : vector<1x8x32xf32> to vector<8x32xf32>
    %c0_i32 = arith.constant 0 : i32
    %c8_i32 = arith.constant 8 : i32
    %12 = arith.muli %c0_i32, %c8_i32 : i32
    %13 = tpu.assume_multiple %12, 8 : i32
    %14 = arith.index_cast %13 : i32 to index
    %c0_15 = arith.constant 0 : index
    %15 = vector.load %arg14[%14, %c0_15] : memref<64x128xf32, #tpu.memory_space<vmem>>, vector<8x128xf32>
    %16 = arith.truncf %9 : vector<8x32xf32> to vector<8x32xbf16>
    %cst_16 = arith.constant dense<0.000000e+00> : vector<8x128xf32>
    %17 = tpu.matmul %16, %2, %cst_16 {dimension_numbers = #tpu.dot_dimension_numbers<[1], [0], [0], [1], [0, 0, 1, 1], [], []>} : vector<8x32xbf16>, vector<32x128xbf16>, vector<8x128xf32> -> vector<8x128xf32>
    %18 = arith.addf %15, %17 : vector<8x128xf32>
    %19 = vector.extract_strided_slice %18 {offsets = [0, 0], sizes = [8, 96], strides = [1, 1]} : vector<8x128xf32> to vector<8x96xf32>
    %20 = arith.negf %19 : vector<8x96xf32>
    %21 = math.exp %20 : vector<8x96xf32>
    %cst_17 = arith.constant 1.000000e+00 : f32
    %22 = vector.broadcast %cst_17 : f32 to vector<8x96xf32>
    %23 = arith.addf %22, %21 : vector<8x96xf32>
    %24 = arith.divf %22, %23 : vector<8x96xf32>
    %25 = vector.extract_strided_slice %18 {offsets = [0, 96], sizes = [8, 32], strides = [1, 1]} : vector<8x128xf32> to vector<8x32xf32>
    %26 = math.tanh %25 : vector<8x32xf32>
    %27 = vector.extract_strided_slice %24 {offsets = [0, 0], sizes = [8, 32], strides = [1, 1]} : vector<8x96xf32> to vector<8x32xf32>
    %28 = vector.extract_strided_slice %24 {offsets = [0, 32], sizes = [8, 32], strides = [1, 1]} : vector<8x96xf32> to vector<8x32xf32>
    %29 = vector.extract_strided_slice %24 {offsets = [0, 64], sizes = [8, 32], strides = [1, 1]} : vector<8x96xf32> to vector<8x32xf32>
    %30 = arith.mulf %28, %11 : vector<8x32xf32>
    %31 = arith.mulf %27, %26 : vector<8x32xf32>
    %32 = arith.addf %30, %31 : vector<8x32xf32>
    %33 = math.tanh %32 : vector<8x32xf32>
    %34 = arith.mulf %29, %33 : vector<8x32xf32>
    %35 = arith.truncf %34 : vector<8x32xf32> to vector<8x32xbf16>
    %36 = arith.index_cast %13 : i32 to index
    %c0_18 = arith.constant 0 : index
    %37 = vector.load %arg15[%36, %c0_18] : memref<64x32xbf16, #tpu.memory_space<vmem>>, vector<8x32xbf16>
    tpu.vector_store %arg15[%36, %c0_18], %35 {strides = array<i32>} : memref<64x32xbf16, #tpu.memory_space<vmem>>, vector<8x32xbf16>,
    %c1_i32 = arith.constant 1 : i32
    %c8_i32_19 = arith.constant 8 : i32
    %38 = arith.muli %c1_i32, %c8_i32_19 : i32
    %39 = tpu.assume_multiple %38, 8 : i32
    %40 = arith.index_cast %39 : i32 to index
    %c0_20 = arith.constant 0 : index
    %41 = vector.load %arg14[%40, %c0_20] : memref<64x128xf32, #tpu.memory_space<vmem>>, vector<8x128xf32>
    %42 = arith.truncf %34 : vector<8x32xf32> to vector<8x32xbf16>
    %cst_21 = arith.constant dense<0.000000e+00> : vector<8x128xf32>
    %43 = tpu.matmul %42, %2, %cst_21 {dimension_numbers = #tpu.dot_dimension_numbers<[1], [0], [0], [1], [0, 0, 1, 1], [], []>} : vector<8x32xbf16>, vector<32x128xbf16>, vector<8x128xf32> -> vector<8x128xf32>
    %44 = arith.addf %41, %43 : vector<8x128xf32>
    %45 = vector.extract_strided_slice %44 {offsets = [0, 0], sizes = [8, 96], strides = [1, 1]} : vector<8x128xf32> to vector<8x96xf32>
    %46 = arith.negf %45 : vector<8x96xf32>
    %47 = math.exp %46 : vector<8x96xf32>
    %cst_22 = arith.constant 1.000000e+00 : f32
    %48 = vector.broadcast %cst_22 : f32 to vector<8x96xf32>
    %49 = arith.addf %48, %47 : vector<8x96xf32>
    %50 = arith.divf %48, %49 : vector<8x96xf32>
    %51 = vector.extract_strided_slice %44 {offsets = [0, 96], sizes = [8, 32], strides = [1, 1]} : vector<8x128xf32> to vector<8x32xf32>
    %52 = math.tanh %51 : vector<8x32xf32>
    %53 = vector.extract_strided_slice %50 {offsets = [0, 0], sizes = [8, 32], strides = [1, 1]} : vector<8x96xf32> to vector<8x32xf32>
    %54 = vector.extract_strided_slice %50 {offsets = [0, 32], sizes = [8, 32], strides = [1, 1]} : vector<8x96xf32> to vector<8x32xf32>
    %55 = vector.extract_strided_slice %50 {offsets = [0, 64], sizes = [8, 32], strides = [1, 1]} : vector<8x96xf32> to vector<8x32xf32>
    %56 = arith.mulf %54, %32 : vector<8x32xf32>
    %57 = arith.mulf %53, %52 : vector<8x32xf32>
    %58 = arith.addf %56, %57 : vector<8x32xf32>
    %59 = math.tanh %58 : vector<8x32xf32>
    %60 = arith.mulf %55, %59 : vector<8x32xf32>
    %61 = arith.truncf %60 : vector<8x32xf32> to vector<8x32xbf16>
    %62 = arith.index_cast %39 : i32 to index
    %c0_23 = arith.constant 0 : index
    %63 = vector.load %arg15[%62, %c0_23] : memref<64x32xbf16, #tpu.memory_space<vmem>>, vector<8x32xbf16>
    tpu.vector_store %arg15[%62, %c0_23], %61 {strides = array<i32>} : memref<64x32xbf16, #tpu.memory_space<vmem>>, vector<8x32xbf16>,
    %c2_i32 = arith.constant 2 : i32
    %c8_i32_24 = arith.constant 8 : i32
    %64 = arith.muli %c2_i32, %c8_i32_24 : i32
    %65 = tpu.assume_multiple %64, 8 : i32
    %66 = arith.index_cast %65 : i32 to index
    %c0_25 = arith.constant 0 : index
    %67 = vector.load %arg14[%66, %c0_25] : memref<64x128xf32, #tpu.memory_space<vmem>>, vector<8x128xf32>
    %68 = arith.truncf %60 : vector<8x32xf32> to vector<8x32xbf16>
    %cst_26 = arith.constant dense<0.000000e+00> : vector<8x128xf32>
    %69 = tpu.matmul %68, %2, %cst_26 {dimension_numbers = #tpu.dot_dimension_numbers<[1], [0], [0], [1], [0, 0, 1, 1], [], []>} : vector<8x32xbf16>, vector<32x128xbf16>, vector<8x128xf32> -> vector<8x128xf32>
    %70 = arith.addf %67, %69 : vector<8x128xf32>
    %71 = vector.extract_strided_slice %70 {offsets = [0, 0], sizes = [8, 96], strides = [1, 1]} : vector<8x128xf32> to vector<8x96xf32>
    %72 = arith.negf %71 : vector<8x96xf32>
    %73 = math.exp %72 : vector<8x96xf32>
    %cst_27 = arith.constant 1.000000e+00 : f32
    %74 = vector.broadcast %cst_27 : f32 to vector<8x96xf32>
    %75 = arith.addf %74, %73 : vector<8x96xf32>
    %76 = arith.divf %74, %75 : vector<8x96xf32>
    %77 = vector.extract_strided_slice %70 {offsets = [0, 96], sizes = [8, 32], strides = [1, 1]} : vector<8x128xf32> to vector<8x32xf32>
    %78 = math.tanh %77 : vector<8x32xf32>
    %79 = vector.extract_strided_slice %76 {offsets = [0, 0], sizes = [8, 32], strides = [1, 1]} : vector<8x96xf32> to vector<8x32xf32>
    %80 = vector.extract_strided_slice %76 {offsets = [0, 32], sizes = [8, 32], strides = [1, 1]} : vector<8x96xf32> to vector<8x32xf32>
    %81 = vector.extract_strided_slice %76 {offsets = [0, 64], sizes = [8, 32], strides = [1, 1]} : vector<8x96xf32> to vector<8x32xf32>
    %82 = arith.mulf %80, %58 : vector<8x32xf32>
    %83 = arith.mulf %79, %78 : vector<8x32xf32>
    %84 = arith.addf %82, %83 : vector<8x32xf32>
    %85 = math.tanh %84 : vector<8x32xf32>
    %86 = arith.mulf %81, %85 : vector<8x32xf32>
    %87 = arith.truncf %86 : vector<8x32xf32> to vector<8x32xbf16>
    %88 = arith.index_cast %65 : i32 to index
    %c0_28 = arith.constant 0 : index
    %89 = vector.load %arg15[%88, %c0_28] : memref<64x32xbf16, #tpu.memory_space<vmem>>, vector<8x32xbf16>
    tpu.vector_store %arg15[%88, %c0_28], %87 {strides = array<i32>} : memref<64x32xbf16, #tpu.memory_space<vmem>>, vector<8x32xbf16>,
    %c3_i32 = arith.constant 3 : i32
    %c8_i32_29 = arith.constant 8 : i32
    %90 = arith.muli %c3_i32, %c8_i32_29 : i32
    %91 = tpu.assume_multiple %90, 8 : i32
    %92 = arith.index_cast %91 : i32 to index
    %c0_30 = arith.constant 0 : index
    %93 = vector.load %arg14[%92, %c0_30] : memref<64x128xf32, #tpu.memory_space<vmem>>, vector<8x128xf32>
    %94 = arith.truncf %86 : vector<8x32xf32> to vector<8x32xbf16>
    %cst_31 = arith.constant dense<0.000000e+00> : vector<8x128xf32>
    %95 = tpu.matmul %94, %2, %cst_31 {dimension_numbers = #tpu.dot_dimension_numbers<[1], [0], [0], [1], [0, 0, 1, 1], [], []>} : vector<8x32xbf16>, vector<32x128xbf16>, vector<8x128xf32> -> vector<8x128xf32>
    %96 = arith.addf %93, %95 : vector<8x128xf32>
    %97 = vector.extract_strided_slice %96 {offsets = [0, 0], sizes = [8, 96], strides = [1, 1]} : vector<8x128xf32> to vector<8x96xf32>
    %98 = arith.negf %97 : vector<8x96xf32>
    %99 = math.exp %98 : vector<8x96xf32>
    %cst_32 = arith.constant 1.000000e+00 : f32
    %100 = vector.broadcast %cst_32 : f32 to vector<8x96xf32>
    %101 = arith.addf %100, %99 : vector<8x96xf32>
    %102 = arith.divf %100, %101 : vector<8x96xf32>
    %103 = vector.extract_strided_slice %96 {offsets = [0, 96], sizes = [8, 32], strides = [1, 1]} : vector<8x128xf32> to vector<8x32xf32>
    %104 = math.tanh %103 : vector<8x32xf32>
    %105 = vector.extract_strided_slice %102 {offsets = [0, 0], sizes = [8, 32], strides = [1, 1]} : vector<8x96xf32> to vector<8x32xf32>
    %106 = vector.extract_strided_slice %102 {offsets = [0, 32], sizes = [8, 32], strides = [1, 1]} : vector<8x96xf32> to vector<8x32xf32>
    %107 = vector.extract_strided_slice %102 {offsets = [0, 64], sizes = [8, 32], strides = [1, 1]} : vector<8x96xf32> to vector<8x32xf32>
    %108 = arith.mulf %106, %84 : vector<8x32xf32>
    %109 = arith.mulf %105, %104 : vector<8x32xf32>
    %110 = arith.addf %108, %109 : vector<8x32xf32>
    %111 = math.tanh %110 : vector<8x32xf32>
    %112 = arith.mulf %107, %111 : vector<8x32xf32>
    %113 = arith.truncf %112 : vector<8x32xf32> to vector<8x32xbf16>
    %114 = arith.index_cast %91 : i32 to index
    %c0_33 = arith.constant 0 : index
    %115 = vector.load %arg15[%114, %c0_33] : memref<64x32xbf16, #tpu.memory_space<vmem>>, vector<8x32xbf16>
    tpu.vector_store %arg15[%114, %c0_33], %113 {strides = array<i32>} : memref<64x32xbf16, #tpu.memory_space<vmem>>, vector<8x32xbf16>,
    %c4_i32 = arith.constant 4 : i32
    %c8_i32_34 = arith.constant 8 : i32
    %116 = arith.muli %c4_i32, %c8_i32_34 : i32
    %117 = tpu.assume_multiple %116, 8 : i32
    %118 = arith.index_cast %117 : i32 to index
    %c0_35 = arith.constant 0 : index
    %119 = vector.load %arg14[%118, %c0_35] : memref<64x128xf32, #tpu.memory_space<vmem>>, vector<8x128xf32>
    %120 = arith.truncf %112 : vector<8x32xf32> to vector<8x32xbf16>
    %cst_36 = arith.constant dense<0.000000e+00> : vector<8x128xf32>
    %121 = tpu.matmul %120, %2, %cst_36 {dimension_numbers = #tpu.dot_dimension_numbers<[1], [0], [0], [1], [0, 0, 1, 1], [], []>} : vector<8x32xbf16>, vector<32x128xbf16>, vector<8x128xf32> -> vector<8x128xf32>
    %122 = arith.addf %119, %121 : vector<8x128xf32>
    %123 = vector.extract_strided_slice %122 {offsets = [0, 0], sizes = [8, 96], strides = [1, 1]} : vector<8x128xf32> to vector<8x96xf32>
    %124 = arith.negf %123 : vector<8x96xf32>
    %125 = math.exp %124 : vector<8x96xf32>
    %cst_37 = arith.constant 1.000000e+00 : f32
    %126 = vector.broadcast %cst_37 : f32 to vector<8x96xf32>
    %127 = arith.addf %126, %125 : vector<8x96xf32>
    %128 = arith.divf %126, %127 : vector<8x96xf32>
    %129 = vector.extract_strided_slice %122 {offsets = [0, 96], sizes = [8, 32], strides = [1, 1]} : vector<8x128xf32> to vector<8x32xf32>
    %130 = math.tanh %129 : vector<8x32xf32>
    %131 = vector.extract_strided_slice %128 {offsets = [0, 0], sizes = [8, 32], strides = [1, 1]} : vector<8x96xf32> to vector<8x32xf32>
    %132 = vector.extract_strided_slice %128 {offsets = [0, 32], sizes = [8, 32], strides = [1, 1]} : vector<8x96xf32> to vector<8x32xf32>
    %133 = vector.extract_strided_slice %128 {offsets = [0, 64], sizes = [8, 32], strides = [1, 1]} : vector<8x96xf32> to vector<8x32xf32>
    %134 = arith.mulf %132, %110 : vector<8x32xf32>
    %135 = arith.mulf %131, %130 : vector<8x32xf32>
    %136 = arith.addf %134, %135 : vector<8x32xf32>
    %137 = math.tanh %136 : vector<8x32xf32>
    %138 = arith.mulf %133, %137 : vector<8x32xf32>
    %139 = arith.truncf %138 : vector<8x32xf32> to vector<8x32xbf16>
    %140 = arith.index_cast %117 : i32 to index
    %c0_38 = arith.constant 0 : index
    %141 = vector.load %arg15[%140, %c0_38] : memref<64x32xbf16, #tpu.memory_space<vmem>>, vector<8x32xbf16>
    tpu.vector_store %arg15[%140, %c0_38], %139 {strides = array<i32>} : memref<64x32xbf16, #tpu.memory_space<vmem>>, vector<8x32xbf16>,
    %c5_i32 = arith.constant 5 : i32
    %c8_i32_39 = arith.constant 8 : i32
    %142 = arith.muli %c5_i32, %c8_i32_39 : i32
    %143 = tpu.assume_multiple %142, 8 : i32
    %144 = arith.index_cast %143 : i32 to index
    %c0_40 = arith.constant 0 : index
    %145 = vector.load %arg14[%144, %c0_40] : memref<64x128xf32, #tpu.memory_space<vmem>>, vector<8x128xf32>
    %146 = arith.truncf %138 : vector<8x32xf32> to vector<8x32xbf16>
    %cst_41 = arith.constant dense<0.000000e+00> : vector<8x128xf32>
    %147 = tpu.matmul %146, %2, %cst_41 {dimension_numbers = #tpu.dot_dimension_numbers<[1], [0], [0], [1], [0, 0, 1, 1], [], []>} : vector<8x32xbf16>, vector<32x128xbf16>, vector<8x128xf32> -> vector<8x128xf32>
    %148 = arith.addf %145, %147 : vector<8x128xf32>
    %149 = vector.extract_strided_slice %148 {offsets = [0, 0], sizes = [8, 96], strides = [1, 1]} : vector<8x128xf32> to vector<8x96xf32>
    %150 = arith.negf %149 : vector<8x96xf32>
    %151 = math.exp %150 : vector<8x96xf32>
    %cst_42 = arith.constant 1.000000e+00 : f32
    %152 = vector.broadcast %cst_42 : f32 to vector<8x96xf32>
    %153 = arith.addf %152, %151 : vector<8x96xf32>
    %154 = arith.divf %152, %153 : vector<8x96xf32>
    %155 = vector.extract_strided_slice %148 {offsets = [0, 96], sizes = [8, 32], strides = [1, 1]} : vector<8x128xf32> to vector<8x32xf32>
    %156 = math.tanh %155 : vector<8x32xf32>
    %157 = vector.extract_strided_slice %154 {offsets = [0, 0], sizes = [8, 32], strides = [1, 1]} : vector<8x96xf32> to vector<8x32xf32>
    %158 = vector.extract_strided_slice %154 {offsets = [0, 32], sizes = [8, 32], strides = [1, 1]} : vector<8x96xf32> to vector<8x32xf32>
    %159 = vector.extract_strided_slice %154 {offsets = [0, 64], sizes = [8, 32], strides = [1, 1]} : vector<8x96xf32> to vector<8x32xf32>
    %160 = arith.mulf %158, %136 : vector<8x32xf32>
    %161 = arith.mulf %157, %156 : vector<8x32xf32>
    %162 = arith.addf %160, %161 : vector<8x32xf32>
    %163 = math.tanh %162 : vector<8x32xf32>
    %164 = arith.mulf %159, %163 : vector<8x32xf32>
    %165 = arith.truncf %164 : vector<8x32xf32> to vector<8x32xbf16>
    %166 = arith.index_cast %143 : i32 to index
    %c0_43 = arith.constant 0 : index
    %167 = vector.load %arg15[%166, %c0_43] : memref<64x32xbf16, #tpu.memory_space<vmem>>, vector<8x32xbf16>
    tpu.vector_store %arg15[%166, %c0_43], %165 {strides = array<i32>} : memref<64x32xbf16, #tpu.memory_space<vmem>>, vector<8x32xbf16>,
    %c6_i32 = arith.constant 6 : i32
    %c8_i32_44 = arith.constant 8 : i32
    %168 = arith.muli %c6_i32, %c8_i32_44 : i32
    %169 = tpu.assume_multiple %168, 8 : i32
    %170 = arith.index_cast %169 : i32 to index
    %c0_45 = arith.constant 0 : index
    %171 = vector.load %arg14[%170, %c0_45] : memref<64x128xf32, #tpu.memory_space<vmem>>, vector<8x128xf32>
    %172 = arith.truncf %164 : vector<8x32xf32> to vector<8x32xbf16>
    %cst_46 = arith.constant dense<0.000000e+00> : vector<8x128xf32>
    %173 = tpu.matmul %172, %2, %cst_46 {dimension_numbers = #tpu.dot_dimension_numbers<[1], [0], [0], [1], [0, 0, 1, 1], [], []>} : vector<8x32xbf16>, vector<32x128xbf16>, vector<8x128xf32> -> vector<8x128xf32>
    %174 = arith.addf %171, %173 : vector<8x128xf32>
    %175 = vector.extract_strided_slice %174 {offsets = [0, 0], sizes = [8, 96], strides = [1, 1]} : vector<8x128xf32> to vector<8x96xf32>
    %176 = arith.negf %175 : vector<8x96xf32>
    %177 = math.exp %176 : vector<8x96xf32>
    %cst_47 = arith.constant 1.000000e+00 : f32
    %178 = vector.broadcast %cst_47 : f32 to vector<8x96xf32>
    %179 = arith.addf %178, %177 : vector<8x96xf32>
    %180 = arith.divf %178, %179 : vector<8x96xf32>
    %181 = vector.extract_strided_slice %174 {offsets = [0, 96], sizes = [8, 32], strides = [1, 1]} : vector<8x128xf32> to vector<8x32xf32>
    %182 = math.tanh %181 : vector<8x32xf32>
    %183 = vector.extract_strided_slice %180 {offsets = [0, 0], sizes = [8, 32], strides = [1, 1]} : vector<8x96xf32> to vector<8x32xf32>
    %184 = vector.extract_strided_slice %180 {offsets = [0, 32], sizes = [8, 32], strides = [1, 1]} : vector<8x96xf32> to vector<8x32xf32>
    %185 = vector.extract_strided_slice %180 {offsets = [0, 64], sizes = [8, 32], strides = [1, 1]} : vector<8x96xf32> to vector<8x32xf32>
    %186 = arith.mulf %184, %162 : vector<8x32xf32>
    %187 = arith.mulf %183, %182 : vector<8x32xf32>
    %188 = arith.addf %186, %187 : vector<8x32xf32>
    %189 = math.tanh %188 : vector<8x32xf32>
    %190 = arith.mulf %185, %189 : vector<8x32xf32>
    %191 = arith.truncf %190 : vector<8x32xf32> to vector<8x32xbf16>
    %192 = arith.index_cast %169 : i32 to index
    %c0_48 = arith.constant 0 : index
    %193 = vector.load %arg15[%192, %c0_48] : memref<64x32xbf16, #tpu.memory_space<vmem>>, vector<8x32xbf16>
    tpu.vector_store %arg15[%192, %c0_48], %191 {strides = array<i32>} : memref<64x32xbf16, #tpu.memory_space<vmem>>, vector<8x32xbf16>,
    %c7_i32 = arith.constant 7 : i32
    %c8_i32_49 = arith.constant 8 : i32
    %194 = arith.muli %c7_i32, %c8_i32_49 : i32
    %195 = tpu.assume_multiple %194, 8 : i32
    %196 = arith.index_cast %195 : i32 to index
    %c0_50 = arith.constant 0 : index
    %197 = vector.load %arg14[%196, %c0_50] : memref<64x128xf32, #tpu.memory_space<vmem>>, vector<8x128xf32>
    %198 = arith.truncf %190 : vector<8x32xf32> to vector<8x32xbf16>
    %cst_51 = arith.constant dense<0.000000e+00> : vector<8x128xf32>
    %199 = tpu.matmul %198, %2, %cst_51 {dimension_numbers = #tpu.dot_dimension_numbers<[1], [0], [0], [1], [0, 0, 1, 1], [], []>} : vector<8x32xbf16>, vector<32x128xbf16>, vector<8x128xf32> -> vector<8x128xf32>
    %200 = arith.addf %197, %199 : vector<8x128xf32>
    %201 = vector.extract_strided_slice %200 {offsets = [0, 0], sizes = [8, 96], strides = [1, 1]} : vector<8x128xf32> to vector<8x96xf32>
    %202 = arith.negf %201 : vector<8x96xf32>
    %203 = math.exp %202 : vector<8x96xf32>
    %cst_52 = arith.constant 1.000000e+00 : f32
    %204 = vector.broadcast %cst_52 : f32 to vector<8x96xf32>
    %205 = arith.addf %204, %203 : vector<8x96xf32>
    %206 = arith.divf %204, %205 : vector<8x96xf32>
    %207 = vector.extract_strided_slice %200 {offsets = [0, 96], sizes = [8, 32], strides = [1, 1]} : vector<8x128xf32> to vector<8x32xf32>
    %208 = math.tanh %207 : vector<8x32xf32>
    %209 = vector.extract_strided_slice %206 {offsets = [0, 0], sizes = [8, 32], strides = [1, 1]} : vector<8x96xf32> to vector<8x32xf32>
    %210 = vector.extract_strided_slice %206 {offsets = [0, 32], sizes = [8, 32], strides = [1, 1]} : vector<8x96xf32> to vector<8x32xf32>
    %211 = vector.extract_strided_slice %206 {offsets = [0, 64], sizes = [8, 32], strides = [1, 1]} : vector<8x96xf32> to vector<8x32xf32>
    %212 = arith.mulf %210, %188 : vector<8x32xf32>
    %213 = arith.mulf %209, %208 : vector<8x32xf32>
    %214 = arith.addf %212, %213 : vector<8x32xf32>
    %215 = math.tanh %214 : vector<8x32xf32>
    %216 = arith.mulf %211, %215 : vector<8x32xf32>
    %217 = arith.truncf %216 : vector<8x32xf32> to vector<8x32xbf16>
    %218 = arith.index_cast %195 : i32 to index
    %c0_53 = arith.constant 0 : index
    %219 = vector.load %arg15[%218, %c0_53] : memref<64x32xbf16, #tpu.memory_space<vmem>>, vector<8x32xbf16>
    tpu.vector_store %arg15[%218, %c0_53], %217 {strides = array<i32>} : memref<64x32xbf16, #tpu.memory_space<vmem>>, vector<8x32xbf16>,
    %c8_i32_54 = arith.constant 8 : i32
    %c0_55 = arith.constant 0 : index
    %c0_56 = arith.constant 0 : index
    %c0_57 = arith.constant 0 : index
    %220 = vector.load %arg12[%c0_55, %c0_56, %c0_57] : memref<2x8x32xf32, #tpu.memory_space<vmem>>, vector<1x8x32xf32>
    %221 = vector.shape_cast %220 : vector<1x8x32xf32> to vector<8x32xf32>
    %222 = vector.shape_cast %216 : vector<8x32xf32> to vector<1x8x32xf32>
    tpu.vector_store %arg12[%c0_55, %c0_56, %c0_57], %222 {strides = array<i32>} : memref<2x8x32xf32, #tpu.memory_space<vmem>>, vector<1x8x32xf32>,
    %c0_58 = arith.constant 0 : index
    %c0_59 = arith.constant 0 : index
    %c0_60 = arith.constant 0 : index
    %223 = vector.load %arg13[%c0_58, %c0_59, %c0_60] : memref<2x8x32xf32, #tpu.memory_space<vmem>>, vector<1x8x32xf32>
    %224 = vector.shape_cast %223 : vector<1x8x32xf32> to vector<8x32xf32>
    %225 = vector.shape_cast %214 : vector<8x32xf32> to vector<1x8x32xf32>
    tpu.vector_store %arg13[%c0_58, %c0_59, %c0_60], %225 {strides = array<i32>} : memref<2x8x32xf32, #tpu.memory_space<vmem>>, vector<1x8x32xf32>,
    %c0_61 = arith.constant 0 : index
    %c0_62 = arith.constant 0 : index
    %226 = vector.load %arg15[%c0_61, %c0_62] : memref<64x32xbf16, #tpu.memory_space<vmem>>, vector<64x32xbf16>
    %c0_63 = arith.constant 0 : index
    %c0_64 = arith.constant 0 : index
    %227 = vector.load %arg6[%c0_63, %c0_64] : memref<32x128xbf16, #tpu.memory_space<vmem>>, vector<32x128xbf16>
    %c0_65 = arith.constant 0 : index
    %c0_66 = arith.constant 0 : index
    %228 = vector.load %arg7[%c0_65, %c0_66] : memref<32x128xbf16, #tpu.memory_space<vmem>>, vector<32x128xbf16>
    %c0_67 = arith.constant 0 : index
    %c0_68 = arith.constant 0 : index
    %229 = vector.load %arg8[%c0_67, %c0_68] : memref<1x128xf32, #tpu.memory_space<vmem>>, vector<1x128xf32>
    %cst_69 = arith.constant dense<0.000000e+00> : vector<64x128xf32>
    %230 = tpu.matmul %226, %227, %cst_69 {dimension_numbers = #tpu.dot_dimension_numbers<[1], [0], [0], [1], [0, 0, 1, 1], [], []>} : vector<64x32xbf16>, vector<32x128xbf16>, vector<64x128xf32> -> vector<64x128xf32>
    %231 = vector.broadcast %229 : vector<1x128xf32> to vector<64x128xf32>
    %232 = arith.addf %230, %231 : vector<64x128xf32>
    %c0_70 = arith.constant 0 : index
    %c0_71 = arith.constant 0 : index
    %233 = vector.load %arg14[%c0_70, %c0_71] : memref<64x128xf32, #tpu.memory_space<vmem>>, vector<64x128xf32>
    tpu.vector_store %arg14[%c0_70, %c0_71], %232 {strides = array<i32>} : memref<64x128xf32, #tpu.memory_space<vmem>>, vector<64x128xf32>,
    %c1 = arith.constant 1 : index
    %c0_72 = arith.constant 0 : index
    %c0_73 = arith.constant 0 : index
    %234 = vector.load %arg1[%c1, %c0_72, %c0_73] : memref<2x8x32xf32, #tpu.memory_space<vmem>>, vector<1x8x32xf32>
    %235 = vector.shape_cast %234 : vector<1x8x32xf32> to vector<8x32xf32>
    %c1_74 = arith.constant 1 : index
    %c0_75 = arith.constant 0 : index
    %c0_76 = arith.constant 0 : index
    %236 = vector.load %arg2[%c1_74, %c0_75, %c0_76] : memref<2x8x32xf32, #tpu.memory_space<vmem>>, vector<1x8x32xf32>
    %237 = vector.shape_cast %236 : vector<1x8x32xf32> to vector<8x32xf32>
    %c0_i32_77 = arith.constant 0 : i32
    %c8_i32_78 = arith.constant 8 : i32
    %238 = arith.muli %c0_i32_77, %c8_i32_78 : i32
    %239 = tpu.assume_multiple %238, 8 : i32
    %240 = arith.index_cast %239 : i32 to index
    %c0_79 = arith.constant 0 : index
    %241 = vector.load %arg14[%240, %c0_79] : memref<64x128xf32, #tpu.memory_space<vmem>>, vector<8x128xf32>
    %242 = arith.truncf %235 : vector<8x32xf32> to vector<8x32xbf16>
    %cst_80 = arith.constant dense<0.000000e+00> : vector<8x128xf32>
    %243 = tpu.matmul %242, %228, %cst_80 {dimension_numbers = #tpu.dot_dimension_numbers<[1], [0], [0], [1], [0, 0, 1, 1], [], []>} : vector<8x32xbf16>, vector<32x128xbf16>, vector<8x128xf32> -> vector<8x128xf32>
    %244 = arith.addf %241, %243 : vector<8x128xf32>
    %245 = vector.extract_strided_slice %244 {offsets = [0, 0], sizes = [8, 96], strides = [1, 1]} : vector<8x128xf32> to vector<8x96xf32>
    %246 = arith.negf %245 : vector<8x96xf32>
    %247 = math.exp %246 : vector<8x96xf32>
    %cst_81 = arith.constant 1.000000e+00 : f32
    %248 = vector.broadcast %cst_81 : f32 to vector<8x96xf32>
    %249 = arith.addf %248, %247 : vector<8x96xf32>
    %250 = arith.divf %248, %249 : vector<8x96xf32>
    %251 = vector.extract_strided_slice %244 {offsets = [0, 96], sizes = [8, 32], strides = [1, 1]} : vector<8x128xf32> to vector<8x32xf32>
    %252 = math.tanh %251 : vector<8x32xf32>
    %253 = vector.extract_strided_slice %250 {offsets = [0, 0], sizes = [8, 32], strides = [1, 1]} : vector<8x96xf32> to vector<8x32xf32>
    %254 = vector.extract_strided_slice %250 {offsets = [0, 32], sizes = [8, 32], strides = [1, 1]} : vector<8x96xf32> to vector<8x32xf32>
    %255 = vector.extract_strided_slice %250 {offsets = [0, 64], sizes = [8, 32], strides = [1, 1]} : vector<8x96xf32> to vector<8x32xf32>
    %256 = arith.mulf %254, %237 : vector<8x32xf32>
    %257 = arith.mulf %253, %252 : vector<8x32xf32>
    %258 = arith.addf %256, %257 : vector<8x32xf32>
    %259 = math.tanh %258 : vector<8x32xf32>
    %260 = arith.mulf %255, %259 : vector<8x32xf32>
    %261 = arith.truncf %260 : vector<8x32xf32> to vector<8x32xbf16>
    %262 = arith.index_cast %239 : i32 to index
    %c0_82 = arith.constant 0 : index
    %263 = vector.load %arg15[%262, %c0_82] : memref<64x32xbf16, #tpu.memory_space<vmem>>, vector<8x32xbf16>
    tpu.vector_store %arg15[%262, %c0_82], %261 {strides = array<i32>} : memref<64x32xbf16, #tpu.memory_space<vmem>>, vector<8x32xbf16>,
    %c1_i32_83 = arith.constant 1 : i32
    %c8_i32_84 = arith.constant 8 : i32
    %264 = arith.muli %c1_i32_83, %c8_i32_84 : i32
    %265 = tpu.assume_multiple %264, 8 : i32
    %266 = arith.index_cast %265 : i32 to index
    %c0_85 = arith.constant 0 : index
    %267 = vector.load %arg14[%266, %c0_85] : memref<64x128xf32, #tpu.memory_space<vmem>>, vector<8x128xf32>
    %268 = arith.truncf %260 : vector<8x32xf32> to vector<8x32xbf16>
    %cst_86 = arith.constant dense<0.000000e+00> : vector<8x128xf32>
    %269 = tpu.matmul %268, %228, %cst_86 {dimension_numbers = #tpu.dot_dimension_numbers<[1], [0], [0], [1], [0, 0, 1, 1], [], []>} : vector<8x32xbf16>, vector<32x128xbf16>, vector<8x128xf32> -> vector<8x128xf32>
    %270 = arith.addf %267, %269 : vector<8x128xf32>
    %271 = vector.extract_strided_slice %270 {offsets = [0, 0], sizes = [8, 96], strides = [1, 1]} : vector<8x128xf32> to vector<8x96xf32>
    %272 = arith.negf %271 : vector<8x96xf32>
    %273 = math.exp %272 : vector<8x96xf32>
    %cst_87 = arith.constant 1.000000e+00 : f32
    %274 = vector.broadcast %cst_87 : f32 to vector<8x96xf32>
    %275 = arith.addf %274, %273 : vector<8x96xf32>
    %276 = arith.divf %274, %275 : vector<8x96xf32>
    %277 = vector.extract_strided_slice %270 {offsets = [0, 96], sizes = [8, 32], strides = [1, 1]} : vector<8x128xf32> to vector<8x32xf32>
    %278 = math.tanh %277 : vector<8x32xf32>
    %279 = vector.extract_strided_slice %276 {offsets = [0, 0], sizes = [8, 32], strides = [1, 1]} : vector<8x96xf32> to vector<8x32xf32>
    %280 = vector.extract_strided_slice %276 {offsets = [0, 32], sizes = [8, 32], strides = [1, 1]} : vector<8x96xf32> to vector<8x32xf32>
    %281 = vector.extract_strided_slice %276 {offsets = [0, 64], sizes = [8, 32], strides = [1, 1]} : vector<8x96xf32> to vector<8x32xf32>
    %282 = arith.mulf %280, %258 : vector<8x32xf32>
    %283 = arith.mulf %279, %278 : vector<8x32xf32>
    %284 = arith.addf %282, %283 : vector<8x32xf32>
    %285 = math.tanh %284 : vector<8x32xf32>
    %286 = arith.mulf %281, %285 : vector<8x32xf32>
    %287 = arith.truncf %286 : vector<8x32xf32> to vector<8x32xbf16>
    %288 = arith.index_cast %265 : i32 to index
    %c0_88 = arith.constant 0 : index
    %289 = vector.load %arg15[%288, %c0_88] : memref<64x32xbf16, #tpu.memory_space<vmem>>, vector<8x32xbf16>
    tpu.vector_store %arg15[%288, %c0_88], %287 {strides = array<i32>} : memref<64x32xbf16, #tpu.memory_space<vmem>>, vector<8x32xbf16>,
    %c2_i32_89 = arith.constant 2 : i32
    %c8_i32_90 = arith.constant 8 : i32
    %290 = arith.muli %c2_i32_89, %c8_i32_90 : i32
    %291 = tpu.assume_multiple %290, 8 : i32
    %292 = arith.index_cast %291 : i32 to index
    %c0_91 = arith.constant 0 : index
    %293 = vector.load %arg14[%292, %c0_91] : memref<64x128xf32, #tpu.memory_space<vmem>>, vector<8x128xf32>
    %294 = arith.truncf %286 : vector<8x32xf32> to vector<8x32xbf16>
    %cst_92 = arith.constant dense<0.000000e+00> : vector<8x128xf32>
    %295 = tpu.matmul %294, %228, %cst_92 {dimension_numbers = #tpu.dot_dimension_numbers<[1], [0], [0], [1], [0, 0, 1, 1], [], []>} : vector<8x32xbf16>, vector<32x128xbf16>, vector<8x128xf32> -> vector<8x128xf32>
    %296 = arith.addf %293, %295 : vector<8x128xf32>
    %297 = vector.extract_strided_slice %296 {offsets = [0, 0], sizes = [8, 96], strides = [1, 1]} : vector<8x128xf32> to vector<8x96xf32>
    %298 = arith.negf %297 : vector<8x96xf32>
    %299 = math.exp %298 : vector<8x96xf32>
    %cst_93 = arith.constant 1.000000e+00 : f32
    %300 = vector.broadcast %cst_93 : f32 to vector<8x96xf32>
    %301 = arith.addf %300, %299 : vector<8x96xf32>
    %302 = arith.divf %300, %301 : vector<8x96xf32>
    %303 = vector.extract_strided_slice %296 {offsets = [0, 96], sizes = [8, 32], strides = [1, 1]} : vector<8x128xf32> to vector<8x32xf32>
    %304 = math.tanh %303 : vector<8x32xf32>
    %305 = vector.extract_strided_slice %302 {offsets = [0, 0], sizes = [8, 32], strides = [1, 1]} : vector<8x96xf32> to vector<8x32xf32>
    %306 = vector.extract_strided_slice %302 {offsets = [0, 32], sizes = [8, 32], strides = [1, 1]} : vector<8x96xf32> to vector<8x32xf32>
    %307 = vector.extract_strided_slice %302 {offsets = [0, 64], sizes = [8, 32], strides = [1, 1]} : vector<8x96xf32> to vector<8x32xf32>
    %308 = arith.mulf %306, %284 : vector<8x32xf32>
    %309 = arith.mulf %305, %304 : vector<8x32xf32>
    %310 = arith.addf %308, %309 : vector<8x32xf32>
    %311 = math.tanh %310 : vector<8x32xf32>
    %312 = arith.mulf %307, %311 : vector<8x32xf32>
    %313 = arith.truncf %312 : vector<8x32xf32> to vector<8x32xbf16>
    %314 = arith.index_cast %291 : i32 to index
    %c0_94 = arith.constant 0 : index
    %315 = vector.load %arg15[%314, %c0_94] : memref<64x32xbf16, #tpu.memory_space<vmem>>, vector<8x32xbf16>
    tpu.vector_store %arg15[%314, %c0_94], %313 {strides = array<i32>} : memref<64x32xbf16, #tpu.memory_space<vmem>>, vector<8x32xbf16>,
    %c3_i32_95 = arith.constant 3 : i32
    %c8_i32_96 = arith.constant 8 : i32
    %316 = arith.muli %c3_i32_95, %c8_i32_96 : i32
    %317 = tpu.assume_multiple %316, 8 : i32
    %318 = arith.index_cast %317 : i32 to index
    %c0_97 = arith.constant 0 : index
    %319 = vector.load %arg14[%318, %c0_97] : memref<64x128xf32, #tpu.memory_space<vmem>>, vector<8x128xf32>
    %320 = arith.truncf %312 : vector<8x32xf32> to vector<8x32xbf16>
    %cst_98 = arith.constant dense<0.000000e+00> : vector<8x128xf32>
    %321 = tpu.matmul %320, %228, %cst_98 {dimension_numbers = #tpu.dot_dimension_numbers<[1], [0], [0], [1], [0, 0, 1, 1], [], []>} : vector<8x32xbf16>, vector<32x128xbf16>, vector<8x128xf32> -> vector<8x128xf32>
    %322 = arith.addf %319, %321 : vector<8x128xf32>
    %323 = vector.extract_strided_slice %322 {offsets = [0, 0], sizes = [8, 96], strides = [1, 1]} : vector<8x128xf32> to vector<8x96xf32>
    %324 = arith.negf %323 : vector<8x96xf32>
    %325 = math.exp %324 : vector<8x96xf32>
    %cst_99 = arith.constant 1.000000e+00 : f32
    %326 = vector.broadcast %cst_99 : f32 to vector<8x96xf32>
    %327 = arith.addf %326, %325 : vector<8x96xf32>
    %328 = arith.divf %326, %327 : vector<8x96xf32>
    %329 = vector.extract_strided_slice %322 {offsets = [0, 96], sizes = [8, 32], strides = [1, 1]} : vector<8x128xf32> to vector<8x32xf32>
    %330 = math.tanh %329 : vector<8x32xf32>
    %331 = vector.extract_strided_slice %328 {offsets = [0, 0], sizes = [8, 32], strides = [1, 1]} : vector<8x96xf32> to vector<8x32xf32>
    %332 = vector.extract_strided_slice %328 {offsets = [0, 32], sizes = [8, 32], strides = [1, 1]} : vector<8x96xf32> to vector<8x32xf32>
    %333 = vector.extract_strided_slice %328 {offsets = [0, 64], sizes = [8, 32], strides = [1, 1]} : vector<8x96xf32> to vector<8x32xf32>
    %334 = arith.mulf %332, %310 : vector<8x32xf32>
    %335 = arith.mulf %331, %330 : vector<8x32xf32>
    %336 = arith.addf %334, %335 : vector<8x32xf32>
    %337 = math.tanh %336 : vector<8x32xf32>
    %338 = arith.mulf %333, %337 : vector<8x32xf32>
    %339 = arith.truncf %338 : vector<8x32xf32> to vector<8x32xbf16>
    %340 = arith.index_cast %317 : i32 to index
    %c0_100 = arith.constant 0 : index
    %341 = vector.load %arg15[%340, %c0_100] : memref<64x32xbf16, #tpu.memory_space<vmem>>, vector<8x32xbf16>
    tpu.vector_store %arg15[%340, %c0_100], %339 {strides = array<i32>} : memref<64x32xbf16, #tpu.memory_space<vmem>>, vector<8x32xbf16>,
    %c4_i32_101 = arith.constant 4 : i32
    %c8_i32_102 = arith.constant 8 : i32
    %342 = arith.muli %c4_i32_101, %c8_i32_102 : i32
    %343 = tpu.assume_multiple %342, 8 : i32
    %344 = arith.index_cast %343 : i32 to index
    %c0_103 = arith.constant 0 : index
    %345 = vector.load %arg14[%344, %c0_103] : memref<64x128xf32, #tpu.memory_space<vmem>>, vector<8x128xf32>
    %346 = arith.truncf %338 : vector<8x32xf32> to vector<8x32xbf16>
    %cst_104 = arith.constant dense<0.000000e+00> : vector<8x128xf32>
    %347 = tpu.matmul %346, %228, %cst_104 {dimension_numbers = #tpu.dot_dimension_numbers<[1], [0], [0], [1], [0, 0, 1, 1], [], []>} : vector<8x32xbf16>, vector<32x128xbf16>, vector<8x128xf32> -> vector<8x128xf32>
    %348 = arith.addf %345, %347 : vector<8x128xf32>
    %349 = vector.extract_strided_slice %348 {offsets = [0, 0], sizes = [8, 96], strides = [1, 1]} : vector<8x128xf32> to vector<8x96xf32>
    %350 = arith.negf %349 : vector<8x96xf32>
    %351 = math.exp %350 : vector<8x96xf32>
    %cst_105 = arith.constant 1.000000e+00 : f32
    %352 = vector.broadcast %cst_105 : f32 to vector<8x96xf32>
    %353 = arith.addf %352, %351 : vector<8x96xf32>
    %354 = arith.divf %352, %353 : vector<8x96xf32>
    %355 = vector.extract_strided_slice %348 {offsets = [0, 96], sizes = [8, 32], strides = [1, 1]} : vector<8x128xf32> to vector<8x32xf32>
    %356 = math.tanh %355 : vector<8x32xf32>
    %357 = vector.extract_strided_slice %354 {offsets = [0, 0], sizes = [8, 32], strides = [1, 1]} : vector<8x96xf32> to vector<8x32xf32>
    %358 = vector.extract_strided_slice %354 {offsets = [0, 32], sizes = [8, 32], strides = [1, 1]} : vector<8x96xf32> to vector<8x32xf32>
    %359 = vector.extract_strided_slice %354 {offsets = [0, 64], sizes = [8, 32], strides = [1, 1]} : vector<8x96xf32> to vector<8x32xf32>
    %360 = arith.mulf %358, %336 : vector<8x32xf32>
    %361 = arith.mulf %357, %356 : vector<8x32xf32>
    %362 = arith.addf %360, %361 : vector<8x32xf32>
    %363 = math.tanh %362 : vector<8x32xf32>
    %364 = arith.mulf %359, %363 : vector<8x32xf32>
    %365 = arith.truncf %364 : vector<8x32xf32> to vector<8x32xbf16>
    %366 = arith.index_cast %343 : i32 to index
    %c0_106 = arith.constant 0 : index
    %367 = vector.load %arg15[%366, %c0_106] : memref<64x32xbf16, #tpu.memory_space<vmem>>, vector<8x32xbf16>
    tpu.vector_store %arg15[%366, %c0_106], %365 {strides = array<i32>} : memref<64x32xbf16, #tpu.memory_space<vmem>>, vector<8x32xbf16>,
    %c5_i32_107 = arith.constant 5 : i32
    %c8_i32_108 = arith.constant 8 : i32
    %368 = arith.muli %c5_i32_107, %c8_i32_108 : i32
    %369 = tpu.assume_multiple %368, 8 : i32
    %370 = arith.index_cast %369 : i32 to index
    %c0_109 = arith.constant 0 : index
    %371 = vector.load %arg14[%370, %c0_109] : memref<64x128xf32, #tpu.memory_space<vmem>>, vector<8x128xf32>
    %372 = arith.truncf %364 : vector<8x32xf32> to vector<8x32xbf16>
    %cst_110 = arith.constant dense<0.000000e+00> : vector<8x128xf32>
    %373 = tpu.matmul %372, %228, %cst_110 {dimension_numbers = #tpu.dot_dimension_numbers<[1], [0], [0], [1], [0, 0, 1, 1], [], []>} : vector<8x32xbf16>, vector<32x128xbf16>, vector<8x128xf32> -> vector<8x128xf32>
    %374 = arith.addf %371, %373 : vector<8x128xf32>
    %375 = vector.extract_strided_slice %374 {offsets = [0, 0], sizes = [8, 96], strides = [1, 1]} : vector<8x128xf32> to vector<8x96xf32>
    %376 = arith.negf %375 : vector<8x96xf32>
    %377 = math.exp %376 : vector<8x96xf32>
    %cst_111 = arith.constant 1.000000e+00 : f32
    %378 = vector.broadcast %cst_111 : f32 to vector<8x96xf32>
    %379 = arith.addf %378, %377 : vector<8x96xf32>
    %380 = arith.divf %378, %379 : vector<8x96xf32>
    %381 = vector.extract_strided_slice %374 {offsets = [0, 96], sizes = [8, 32], strides = [1, 1]} : vector<8x128xf32> to vector<8x32xf32>
    %382 = math.tanh %381 : vector<8x32xf32>
    %383 = vector.extract_strided_slice %380 {offsets = [0, 0], sizes = [8, 32], strides = [1, 1]} : vector<8x96xf32> to vector<8x32xf32>
    %384 = vector.extract_strided_slice %380 {offsets = [0, 32], sizes = [8, 32], strides = [1, 1]} : vector<8x96xf32> to vector<8x32xf32>
    %385 = vector.extract_strided_slice %380 {offsets = [0, 64], sizes = [8, 32], strides = [1, 1]} : vector<8x96xf32> to vector<8x32xf32>
    %386 = arith.mulf %384, %362 : vector<8x32xf32>
    %387 = arith.mulf %383, %382 : vector<8x32xf32>
    %388 = arith.addf %386, %387 : vector<8x32xf32>
    %389 = math.tanh %388 : vector<8x32xf32>
    %390 = arith.mulf %385, %389 : vector<8x32xf32>
    %391 = arith.truncf %390 : vector<8x32xf32> to vector<8x32xbf16>
    %392 = arith.index_cast %369 : i32 to index
    %c0_112 = arith.constant 0 : index
    %393 = vector.load %arg15[%392, %c0_112] : memref<64x32xbf16, #tpu.memory_space<vmem>>, vector<8x32xbf16>
    tpu.vector_store %arg15[%392, %c0_112], %391 {strides = array<i32>} : memref<64x32xbf16, #tpu.memory_space<vmem>>, vector<8x32xbf16>,
    %c6_i32_113 = arith.constant 6 : i32
    %c8_i32_114 = arith.constant 8 : i32
    %394 = arith.muli %c6_i32_113, %c8_i32_114 : i32
    %395 = tpu.assume_multiple %394, 8 : i32
    %396 = arith.index_cast %395 : i32 to index
    %c0_115 = arith.constant 0 : index
    %397 = vector.load %arg14[%396, %c0_115] : memref<64x128xf32, #tpu.memory_space<vmem>>, vector<8x128xf32>
    %398 = arith.truncf %390 : vector<8x32xf32> to vector<8x32xbf16>
    %cst_116 = arith.constant dense<0.000000e+00> : vector<8x128xf32>
    %399 = tpu.matmul %398, %228, %cst_116 {dimension_numbers = #tpu.dot_dimension_numbers<[1], [0], [0], [1], [0, 0, 1, 1], [], []>} : vector<8x32xbf16>, vector<32x128xbf16>, vector<8x128xf32> -> vector<8x128xf32>
    %400 = arith.addf %397, %399 : vector<8x128xf32>
    %401 = vector.extract_strided_slice %400 {offsets = [0, 0], sizes = [8, 96], strides = [1, 1]} : vector<8x128xf32> to vector<8x96xf32>
    %402 = arith.negf %401 : vector<8x96xf32>
    %403 = math.exp %402 : vector<8x96xf32>
    %cst_117 = arith.constant 1.000000e+00 : f32
    %404 = vector.broadcast %cst_117 : f32 to vector<8x96xf32>
    %405 = arith.addf %404, %403 : vector<8x96xf32>
    %406 = arith.divf %404, %405 : vector<8x96xf32>
    %407 = vector.extract_strided_slice %400 {offsets = [0, 96], sizes = [8, 32], strides = [1, 1]} : vector<8x128xf32> to vector<8x32xf32>
    %408 = math.tanh %407 : vector<8x32xf32>
    %409 = vector.extract_strided_slice %406 {offsets = [0, 0], sizes = [8, 32], strides = [1, 1]} : vector<8x96xf32> to vector<8x32xf32>
    %410 = vector.extract_strided_slice %406 {offsets = [0, 32], sizes = [8, 32], strides = [1, 1]} : vector<8x96xf32> to vector<8x32xf32>
    %411 = vector.extract_strided_slice %406 {offsets = [0, 64], sizes = [8, 32], strides = [1, 1]} : vector<8x96xf32> to vector<8x32xf32>
    %412 = arith.mulf %410, %388 : vector<8x32xf32>
    %413 = arith.mulf %409, %408 : vector<8x32xf32>
    %414 = arith.addf %412, %413 : vector<8x32xf32>
    %415 = math.tanh %414 : vector<8x32xf32>
    %416 = arith.mulf %411, %415 : vector<8x32xf32>
    %417 = arith.truncf %416 : vector<8x32xf32> to vector<8x32xbf16>
    %418 = arith.index_cast %395 : i32 to index
    %c0_118 = arith.constant 0 : index
    %419 = vector.load %arg15[%418, %c0_118] : memref<64x32xbf16, #tpu.memory_space<vmem>>, vector<8x32xbf16>
    tpu.vector_store %arg15[%418, %c0_118], %417 {strides = array<i32>} : memref<64x32xbf16, #tpu.memory_space<vmem>>, vector<8x32xbf16>,
    %c7_i32_119 = arith.constant 7 : i32
    %c8_i32_120 = arith.constant 8 : i32
    %420 = arith.muli %c7_i32_119, %c8_i32_120 : i32
    %421 = tpu.assume_multiple %420, 8 : i32
    %422 = arith.index_cast %421 : i32 to index
    %c0_121 = arith.constant 0 : index
    %423 = vector.load %arg14[%422, %c0_121] : memref<64x128xf32, #tpu.memory_space<vmem>>, vector<8x128xf32>
    %424 = arith.truncf %416 : vector<8x32xf32> to vector<8x32xbf16>
    %cst_122 = arith.constant dense<0.000000e+00> : vector<8x128xf32>
    %425 = tpu.matmul %424, %228, %cst_122 {dimension_numbers = #tpu.dot_dimension_numbers<[1], [0], [0], [1], [0, 0, 1, 1], [], []>} : vector<8x32xbf16>, vector<32x128xbf16>, vector<8x128xf32> -> vector<8x128xf32>
    %426 = arith.addf %423, %425 : vector<8x128xf32>
    %427 = vector.extract_strided_slice %426 {offsets = [0, 0], sizes = [8, 96], strides = [1, 1]} : vector<8x128xf32> to vector<8x96xf32>
    %428 = arith.negf %427 : vector<8x96xf32>
    %429 = math.exp %428 : vector<8x96xf32>
    %cst_123 = arith.constant 1.000000e+00 : f32
    %430 = vector.broadcast %cst_123 : f32 to vector<8x96xf32>
    %431 = arith.addf %430, %429 : vector<8x96xf32>
    %432 = arith.divf %430, %431 : vector<8x96xf32>
    %433 = vector.extract_strided_slice %426 {offsets = [0, 96], sizes = [8, 32], strides = [1, 1]} : vector<8x128xf32> to vector<8x32xf32>
    %434 = math.tanh %433 : vector<8x32xf32>
    %435 = vector.extract_strided_slice %432 {offsets = [0, 0], sizes = [8, 32], strides = [1, 1]} : vector<8x96xf32> to vector<8x32xf32>
    %436 = vector.extract_strided_slice %432 {offsets = [0, 32], sizes = [8, 32], strides = [1, 1]} : vector<8x96xf32> to vector<8x32xf32>
    %437 = vector.extract_strided_slice %432 {offsets = [0, 64], sizes = [8, 32], strides = [1, 1]} : vector<8x96xf32> to vector<8x32xf32>
    %438 = arith.mulf %436, %414 : vector<8x32xf32>
    %439 = arith.mulf %435, %434 : vector<8x32xf32>
    %440 = arith.addf %438, %439 : vector<8x32xf32>
    %441 = math.tanh %440 : vector<8x32xf32>
    %442 = arith.mulf %437, %441 : vector<8x32xf32>
    %443 = arith.truncf %442 : vector<8x32xf32> to vector<8x32xbf16>
    %444 = arith.index_cast %421 : i32 to index
    %c0_124 = arith.constant 0 : index
    %445 = vector.load %arg15[%444, %c0_124] : memref<64x32xbf16, #tpu.memory_space<vmem>>, vector<8x32xbf16>
    tpu.vector_store %arg15[%444, %c0_124], %443 {strides = array<i32>} : memref<64x32xbf16, #tpu.memory_space<vmem>>, vector<8x32xbf16>,
    %c8_i32_125 = arith.constant 8 : i32
    %c1_126 = arith.constant 1 : index
    %c0_127 = arith.constant 0 : index
    %c0_128 = arith.constant 0 : index
    %446 = vector.load %arg12[%c1_126, %c0_127, %c0_128] : memref<2x8x32xf32, #tpu.memory_space<vmem>>, vector<1x8x32xf32>
    %447 = vector.shape_cast %446 : vector<1x8x32xf32> to vector<8x32xf32>
    %448 = vector.shape_cast %442 : vector<8x32xf32> to vector<1x8x32xf32>
    tpu.vector_store %arg12[%c1_126, %c0_127, %c0_128], %448 {strides = array<i32>} : memref<2x8x32xf32, #tpu.memory_space<vmem>>, vector<1x8x32xf32>,
    %c1_129 = arith.constant 1 : index
    %c0_130 = arith.constant 0 : index
    %c0_131 = arith.constant 0 : index
    %449 = vector.load %arg13[%c1_129, %c0_130, %c0_131] : memref<2x8x32xf32, #tpu.memory_space<vmem>>, vector<1x8x32xf32>
    %450 = vector.shape_cast %449 : vector<1x8x32xf32> to vector<8x32xf32>
    %451 = vector.shape_cast %440 : vector<8x32xf32> to vector<1x8x32xf32>
    tpu.vector_store %arg13[%c1_129, %c0_130, %c0_131], %451 {strides = array<i32>} : memref<2x8x32xf32, #tpu.memory_space<vmem>>, vector<1x8x32xf32>,
    %c0_132 = arith.constant 0 : index
    %c0_133 = arith.constant 0 : index
    %452 = vector.load %arg15[%c0_132, %c0_133] : memref<64x32xbf16, #tpu.memory_space<vmem>>, vector<64x32xbf16>
    %c0_134 = arith.constant 0 : index
    %c0_135 = arith.constant 0 : index
    %453 = vector.load %arg9[%c0_134, %c0_135] : memref<32x128xbf16, #tpu.memory_space<vmem>>, vector<32x128xbf16>
    %cst_136 = arith.constant dense<0.000000e+00> : vector<64x128xf32>
    %454 = tpu.matmul %452, %453, %cst_136 {dimension_numbers = #tpu.dot_dimension_numbers<[1], [0], [0], [1], [0, 0, 1, 1], [], []>} : vector<64x32xbf16>, vector<32x128xbf16>, vector<64x128xf32> -> vector<64x128xf32>
    %c0_137 = arith.constant 0 : index
    %c0_138 = arith.constant 0 : index
    %455 = vector.load %arg10[%c0_137, %c0_138] : memref<1x128xf32, #tpu.memory_space<vmem>>, vector<1x128xf32>
    %456 = vector.broadcast %455 : vector<1x128xf32> to vector<64x128xf32>
    %457 = arith.addf %454, %456 : vector<64x128xf32>
    %c0_139 = arith.constant 0 : index
    %c0_140 = arith.constant 0 : index
    %458 = vector.load %arg11[%c0_139, %c0_140] : memref<64x128xf32, #tpu.memory_space<vmem>>, vector<64x128xf32>
    tpu.vector_store %arg11[%c0_139, %c0_140], %457 {strides = array<i32>} : memref<64x128xf32, #tpu.memory_space<vmem>>, vector<64x128xf32>,
    return
  }
}

</mosaic_0001>

<llo_original>
// kernel: lstm_language_model.1
$region0: #{lstm_language_model.1}
  #allocation0 [shape = 'u32[]', space=smem, size = 0x4, offset = 0x4, fixed_abs, tag = 'smem constant byte address 0x4 - core index']
  #allocation1 [shape = 'u32[144,128]{1,0:T(1,128)}', space=vmem, size = 0x12000, scoped, tag = 'internal scratch']
  #allocation2 [shape = 'f32[64,128]{1,0:T(8,128)}', space=vmem, size = 0x8000, scoped, tag = 'scratch operand']
  #allocation3 [shape = 'bf16[64,32]{1,0:T(8,128)(2,1)}', space=vmem, size = 0x4000, scoped, tag = 'scratch operand']
  %s0 = inlined_call_operand.vmem [shape: bf16[64,32], index: 0, kind: input, shape index: {}]
  %s1 = inlined_call_operand.vmem [shape: f32[2,8,32], index: 1, kind: input, shape index: {}]
  %s2 = inlined_call_operand.vmem [shape: f32[2,8,32], index: 2, kind: input, shape index: {}]
  %s3 = inlined_call_operand.vmem [shape: bf16[32,128], index: 3, kind: input, shape index: {}]
  %s4 = inlined_call_operand.vmem [shape: bf16[32,128], index: 4, kind: input, shape index: {}]
  %s5 = inlined_call_operand.vmem [shape: f32[1,128], index: 5, kind: input, shape index: {}]
  %s6 = inlined_call_operand.vmem [shape: bf16[32,128], index: 6, kind: input, shape index: {}]
  %s7 = inlined_call_operand.vmem [shape: bf16[32,128], index: 7, kind: input, shape index: {}]
  %s8 = inlined_call_operand.vmem [shape: f32[1,128], index: 8, kind: input, shape index: {}]
  %s9 = inlined_call_operand.vmem [shape: bf16[32,128], index: 9, kind: input, shape index: {}]
  %s10 = inlined_call_operand.vmem [shape: f32[1,128], index: 10, kind: input, shape index: {}]
  %s11 = inlined_call_operand.vmem [shape: f32[64,128], index: 11, kind: output, shape index: {0}]
  %s12 = inlined_call_operand.hbm [shape: f32[2,8,32], index: 12, kind: output, shape index: {1}]
  %s13 = inlined_call_operand.hbm [shape: f32[2,8,32], index: 13, kind: output, shape index: {2}]
  %14 = xla_tuple %s11, %s12, %s13
  %s15 = sld [smem:[#allocation0]]
  $region70: #{lstm_language_model.1} parent=0
    _
  %s17 = ssub.s32 1, %s15
  %s18 = scalar_select 0, %s17, %s15
  $region1: #{lstm_language_model.1} parent=0
    #allocation4 [shape = 'u8[8192]{0}', space=vmem, size = 0x2000, scoped, tag = 'output window, operand 1, single buffered']
    #allocation5 [shape = 's32[1]{0}', space=sflag, size = 0x4, scoped, tag = 'scoped memory for lstm_language_model.1']
    #allocation6 [shape = 'u8[8192]{0}', space=vmem, size = 0x2000, scoped, tag = 'output window, operand 2, single buffered']
    #allocation7 [shape = 's32[1]{0}', space=sflag, size = 0x4, scoped, tag = 'scoped memory for lstm_language_model.1']
    %19 = vsyncpa [#allocation5], 0
    %20 = vsyncpa [#allocation7], 0
    // Predicated region
    $region2: #{lstm_language_model.1} parent=1 // pred_check
      _
    $region3: #{lstm_language_model.1} parent=1 // pred_check_branch
      %22 = sbr.rel (0) target = $region5
    $region4: #{lstm_language_model.1} parent=1 // pred_region
      _
    $region5: #{lstm_language_model.1} parent=1 // pred_fallthru
      _
    // Predicated region
    $region6: #{lstm_language_model.1} parent=1 // pred_check
      _
    $region7: #{lstm_language_model.1} parent=1 // pred_check_branch
      %24 = sbr.rel (0) target = $region9
    $region8: #{lstm_language_model.1} parent=1 // pred_region
      _
    $region9: #{lstm_language_model.1} parent=1 // pred_fallthru
      _
    // Predicated region
    $region10: #{lstm_language_model.1} parent=1 // pred_check
      _
    $region11: #{lstm_language_model.1} parent=1 // pred_check_branch
      %26 = sbr.rel (0) target = $region13
    $region12: #{lstm_language_model.1} parent=1 // pred_region
      _
    $region13: #{lstm_language_model.1} parent=1 // pred_fallthru
      _
    // Predicated region
    $region14: #{lstm_language_model.1} parent=1 // pred_check
      _
    $region15: #{lstm_language_model.1} parent=1 // pred_check_branch
      %28 = sbr.rel (0) target = $region17
    $region16: #{lstm_language_model.1} parent=1 // pred_region
      _
    $region17: #{lstm_language_model.1} parent=1 // pred_fallthru
      _
    // Predicated region
    $region18: #{lstm_language_model.1} parent=1 // pred_check
      _
    $region19: #{lstm_language_model.1} parent=1 // pred_check_branch
      %30 = sbr.rel (0) target = $region21
    $region20: #{lstm_language_model.1} parent=1 // pred_region
      _
    $region21: #{lstm_language_model.1} parent=1 // pred_fallthru
      _
    // Predicated region
    $region22: #{lstm_language_model.1} parent=1 // pred_check
      _
    $region23: #{lstm_language_model.1} parent=1 // pred_check_branch
      %32 = sbr.rel (0) target = $region25
    $region24: #{lstm_language_model.1} parent=1 // pred_region
      _
    $region25: #{lstm_language_model.1} parent=1 // pred_fallthru
      _
    // Predicated region
    $region26: #{lstm_language_model.1} parent=1 // pred_check
      _
    $region27: #{lstm_language_model.1} parent=1 // pred_check_branch
      %34 = sbr.rel (0) target = $region29
    $region28: #{lstm_language_model.1} parent=1 // pred_region
      _
    $region29: #{lstm_language_model.1} parent=1 // pred_fallthru
      _
    // Predicated region
    $region30: #{lstm_language_model.1} parent=1 // pred_check
      _
    $region31: #{lstm_language_model.1} parent=1 // pred_check_branch
      %36 = sbr.rel (0) target = $region33
    $region32: #{lstm_language_model.1} parent=1 // pred_region
      _
    $region33: #{lstm_language_model.1} parent=1 // pred_fallthru
      _
    // Predicated region
    $region34: #{lstm_language_model.1} parent=1 // pred_check
      _
    $region35: #{lstm_language_model.1} parent=1 // pred_check_branch
      %38 = sbr.rel (0) target = $region37
    $region36: #{lstm_language_model.1} parent=1 // pred_region
      _
    $region37: #{lstm_language_model.1} parent=1 // pred_fallthru
      _
    // Predicated region
    $region38: #{lstm_language_model.1} parent=1 // pred_check
      _
    $region39: #{lstm_language_model.1} parent=1 // pred_check_branch
      %40 = sbr.rel (0) target = $region41
    $region40: #{lstm_language_model.1} parent=1 // pred_region
      _
    $region41: #{lstm_language_model.1} parent=1 // pred_fallthru
      _
    // Predicated region
    $region42: #{lstm_language_model.1} parent=1 // pred_check
      _
    $region43: #{lstm_language_model.1} parent=1 // pred_check_branch
      %42 = sbr.rel (0) target = $region45
    $region44: #{lstm_language_model.1} parent=1 // pred_region
      _
    $region45: #{lstm_language_model.1} parent=1 // pred_fallthru
      _
    %v44 = vld [vmem:[%s0] sm:$0xf]
    %v45 = vld [vmem:[%s0 + $0x4] sm:$0xf]
    %v46 = vld [vmem:[%s0 + $0x8] sm:$0xf]
    %v47 = vld [vmem:[%s0 + $0xc] sm:$0xf]
    %v48 = vld [vmem:[%s0 + $0x10] sm:$0xf]
    %v49 = vld [vmem:[%s0 + $0x14] sm:$0xf]
    %v50 = vld [vmem:[%s0 + $0x18] sm:$0xf]
    %v51 = vld [vmem:[%s0 + $0x1c] sm:$0xf]
    %v52 = vld [vmem:[%s3] sm:$0xf]
    %v53 = vld [vmem:[%s3 + $0x4] sm:$0xf]
    %v54 = vld [vmem:[%s3 + $0x8] sm:$0xf]
    %v55 = vld [vmem:[%s3 + $0xc] sm:$0xf]
    %v56 = vld [vmem:[%s4] sm:$0xf]
    %v57 = vld [vmem:[%s4 + $0x4] sm:$0xf]
    %v58 = vld [vmem:[%s4 + $0x8] sm:$0xf]
    %v59 = vld [vmem:[%s4 + $0xc] sm:$0xf]
    %v60 = vld [vmem:[%s5] sm:$0x1]
    %v62 = vlaneseq
    %v63 = vshrl.u32 %v62, 7
    %v64 = vsub.s32 0, %v63
    %v65 = vrot.slane %v60, %v64
    %v75 = vunpack.c.l.b16 %v44
    %v76 = vunpack.c.l.b16 %v45
    %v77 = vunpack.c.l.b16 %v46
    %v78 = vunpack.c.l.b16 %v47
    %v79 = vunpack.c.l.b16 %v48
    %v80 = vunpack.c.l.b16 %v49
    %v81 = vunpack.c.l.b16 %v50
    %v82 = vunpack.c.l.b16 %v51
    %v83 = vpack.c.b16 %v76, %v75
    %v84 = vpack.c.b16 %v78, %v77
    %v85 = vpack.c.b16 %v80, %v79
    %v86 = vpack.c.b16 %v82, %v81
    %v91 = vunpack.c.l.b16 %v52
    %v92 = vunpack.c.l.b16 %v53
    %v93 = vunpack.c.l.b16 %v54
    %v94 = vunpack.c.l.b16 %v55
    %v95 = vpack.c.b16 %v92, %v91
    %v96 = vpack.c.b16 %v94, %v93
    %vm99 = vcmask 261120
    %v101 = vsel %vm99, %v83, 0
    %v104 = vsel %vm99, %v84, 0
    %v107 = vsel %vm99, %v85, 0
    %v110 = vsel %vm99, %v86, 0
    %112 = vmatprep.subr.bf16.mxu0 0
    %113 = vmatpush1.bf16.msra.mxu0 0
    %114 = vmatprep.subr.bf16.mxu0 0
    %115 = vmatpush1.bf16.msra.mxu0 0
    %116 = vmatprep.subr.bf16.mxu0 0
    %117 = vmatpush1.bf16.msra.mxu0 0
    %118 = vmatprep.subr.bf16.mxu0 0
    %119 = vmatpush1.bf16.msra.mxu0 0
    %120 = vmatprep.subr.bf16.mxu0 0
    %121 = vmatpush1.bf16.msra.mxu0 0
    %122 = vmatprep.subr.bf16.mxu0 0
    %123 = vmatpush1.bf16.msra.mxu0 0
    %124 = vmatprep.subr.bf16.mxu0 0
    %125 = vmatpush1.bf16.msra.mxu0 %v96
    %126 = vmatprep.subr.bf16.mxu0 0
    %127 = vmatpush1.bf16.msra.mxu0 %v95
    %128 = vmatprep.subr.bf16.mxu0 0
    %129 = vmatpush2.bf16.msra.mxu0 0
    %130 = vmatprep.subr.bf16.mxu0 0
    %131 = vmatpush2.bf16.msra.mxu0 0
    %132 = vmatprep.subr.bf16.mxu0 0
    %133 = vmatpush2.bf16.msra.mxu0 0
    %134 = vmatprep.subr.bf16.mxu0 0
    %135 = vmatpush2.bf16.msra.mxu0 0
    %136 = vmatprep.subr.bf16.mxu0 0
    %137 = vmatpush2.bf16.msra.mxu0 0
    %138 = vmatprep.subr.bf16.mxu0 0
    %139 = vmatpush2.bf16.msra.mxu0 0
    %140 = vmatprep.subr.bf16.mxu0 0
    %141 = vmatpush2.bf16.msra.mxu0 0
    %142 = vmatprep.subr.bf16.mxu0 0
    %143 = vmatpush2.bf16.msra.mxu0 0
    %144 = vmatprep.mubr.bf16.mxu0 0
    %145 = vmatmul.mubr.bf16.gmra.mxu0 %v101
    %v146 = vpop.f32.mrf.mxu0
    %v147 = vadd.f32 %v65, %v146
    %v148 = vpop.f32.mrf.mxu0
    %v149 = vpop.f32.mrf.mxu0
    %v150 = vadd.f32 %v65, %v149
    %v151 = vpop.f32.mrf.mxu0
    %152 = vmatprep.mubr.bf16.mxu0 0
    %153 = vmatmul.mubr.bf16.gmra.mxu0 %v104
    %v154 = vpop.f32.mrf.mxu0
    %v155 = vadd.f32 %v65, %v154
    %v156 = vpop.f32.mrf.mxu0
    %v157 = vpop.f32.mrf.mxu0
    %v158 = vadd.f32 %v65, %v157
    %v159 = vpop.f32.mrf.mxu0
    %160 = vmatprep.mubr.bf16.mxu0 0
    %161 = vmatmul.mubr.bf16.gmra.mxu0 %v107
    %v162 = vpop.f32.mrf.mxu0
    %v163 = vadd.f32 %v65, %v162
    %v164 = vpop.f32.mrf.mxu0
    %v165 = vpop.f32.mrf.mxu0
    %v166 = vadd.f32 %v65, %v165
    %v167 = vpop.f32.mrf.mxu0
    %168 = vmatprep.mubr.bf16.mxu0 0
    %169 = vmatmul.mubr.bf16.gmra.mxu0 %v110
    %v170 = vpop.f32.mrf.mxu0
    %v171 = vadd.f32 %v65, %v170
    %v172 = vpop.f32.mrf.mxu0
    %v173 = vpop.f32.mrf.mxu0
    %v174 = vadd.f32 %v65, %v173
    %v175 = vpop.f32.mrf.mxu0
    %176 = vdwg.mxu0
    %177 = vst [vmem:[#allocation2] sm:$0xff] %v147
    %178 = vst [vmem:[#allocation2 + $0x8] sm:$0xff] %v150
    %179 = vst [vmem:[#allocation2 + $0x10] sm:$0xff] %v155
    %180 = vst [vmem:[#allocation2 + $0x18] sm:$0xff] %v158
    %181 = vst [vmem:[#allocation2 + $0x20] sm:$0xff] %v163
    %182 = vst [vmem:[#allocation2 + $0x28] sm:$0xff] %v166
    %183 = vst [vmem:[#allocation2 + $0x30] sm:$0xff] %v171
    %184 = vst [vmem:[#allocation2 + $0x38] sm:$0xff] %v174
    %v185 = vld [vmem:[%s1] sm:$0xff]
    %v186 = vld [vmem:[%s2] sm:$0xff]
    %v187 = vld [vmem:[#allocation2] sm:$0xff]
    %v188 = vpack.c.bf16 %v185, %v185
    %v193 = vunpack.c.l.b16 %v56
    %v194 = vunpack.c.l.b16 %v57
    %v195 = vunpack.c.l.b16 %v58
    %v196 = vunpack.c.l.b16 %v59
    %v197 = vpack.c.b16 %v194, %v193
    %v198 = vpack.c.b16 %v196, %v195
    %v202 = vsel %vm99, %v188, 0
    %204 = vmatprep.subr.bf16.mxu0 0
    %205 = vmatpush1.bf16.msra.mxu0 0
    %206 = vmatprep.subr.bf16.mxu0 0
    %207 = vmatpush1.bf16.msra.mxu0 0
    %208 = vmatprep.subr.bf16.mxu0 0
    %209 = vmatpush1.bf16.msra.mxu0 0
    %210 = vmatprep.subr.bf16.mxu0 0
    %211 = vmatpush1.bf16.msra.mxu0 0
    %212 = vmatprep.subr.bf16.mxu0 0
    %213 = vmatpush1.bf16.msra.mxu0 0
    %214 = vmatprep.subr.bf16.mxu0 0
    %215 = vmatpush1.bf16.msra.mxu0 0
    %216 = vmatprep.subr.bf16.mxu0 0
    %217 = vmatpush1.bf16.msra.mxu0 %v198
    %218 = vmatprep.subr.bf16.mxu0 0
    %219 = vmatpush1.bf16.msra.mxu0 %v197
    %220 = vmatprep.subr.bf16.mxu0 0
    %221 = vmatpush2.bf16.msra.mxu0 0
    %222 = vmatprep.subr.bf16.mxu0 0
    %223 = vmatpush2.bf16.msra.mxu0 0
    %224 = vmatprep.subr.bf16.mxu0 0
    %225 = vmatpush2.bf16.msra.mxu0 0
    %226 = vmatprep.subr.bf16.mxu0 0
    %227 = vmatpush2.bf16.msra.mxu0 0
    %228 = vmatprep.subr.bf16.mxu0 0
    %229 = vmatpush2.bf16.msra.mxu0 0
    %230 = vmatprep.subr.bf16.mxu0 0
    %231 = vmatpush2.bf16.msra.mxu0 0
    %232 = vmatprep.subr.bf16.mxu0 0
    %233 = vmatpush2.bf16.msra.mxu0 0
    %234 = vmatprep.subr.bf16.mxu0 0
    %235 = vmatpush2.bf16.msra.mxu0 0
    %236 = vmatprep.mubr.bf16.mxu0 0
    %237 = vmatmul.mubr.bf16.gmra.mxu0 %v202
    %v238 = vpop.f32.mrf.mxu0
    %v239 = vadd.f32 0.0, %v238
    %v240 = vpop.f32.mrf.mxu0
    %v241 = vpop.f32.mrf.mxu0
    %v242 = vpop.f32.mrf.mxu0
    %243 = vdwg.mxu0
    %v244 = vadd.f32 %v187, %v239
    %v245 = vxor.u32 %v244, 2147483648
    %v246 = vmul.f32 %v245, 1.442695
    %v247 = vpow.pop %v246
    %v248 = vadd.f32 %v247, 1.0
    %v249 = vrcp.pop %v248
    %v250 = vmul.f32 1.0, %v249
    %v251 = vtanh.pop %v244
    %253 = vrot.lane.b32.xlu0 %v186, 32
    %v254 = vpop.permute.xlu0 %253
    %v256 = vmul.f32 %v250, %v254
    %258 = vrot.lane.b32.xlu0 %v251, 32
    %v259 = vpop.permute.xlu0 %258
    %v261 = vmul.f32 %v250, %v259
    %263 = vrot.lane.b32.xlu0 %v261, 32
    %v264 = vpop.permute.xlu0 %263
    %v266 = vadd.f32 %v256, %v264
    %v267 = vtanh.pop %v266
    %269 = vrot.lane.b32.xlu0 %v267, 32
    %v270 = vpop.permute.xlu0 %269
    %v272 = vmul.f32 %v250, %v270
    %v273 = vpack.c.bf16 %v272, %v272
    %v275 = vunpack.c.l.b16 %v273
    %v276 = vpack.c.b16 %v275, %v275
    %277 = vrot.lane.b32.xlu0 %v276, 64
    %v278 = vpop.permute.xlu0 %277
    %vm280 = vcmask 257024
    %281 = vst.msk [vmem:[#allocation3] sm:$0xf] %vm280, %v278
    %s282 = scalar_lea.vmem [#allocation2], 8
    %v283 = vld [vmem:[%s282] sm:$0xff]
    %284 = vrot.lane.b32.xlu0 %v273, 64
    %v285 = vpop.permute.xlu0 %284
    %v287 = vsel %vm99, %v285, 0
    %289 = vmatprep.subr.bf16.mxu0 0
    %290 = vmatpush1.bf16.msra.mxu0 0
    %291 = vmatprep.subr.bf16.mxu0 0
    %292 = vmatpush1.bf16.msra.mxu0 0
    %293 = vmatprep.subr.bf16.mxu0 0
    %294 = vmatpush1.bf16.msra.mxu0 0
    %295 = vmatprep.subr.bf16.mxu0 0
    %296 = vmatpush1.bf16.msra.mxu0 0
    %297 = vmatprep.subr.bf16.mxu0 0
    %298 = vmatpush1.bf16.msra.mxu0 0
    %299 = vmatprep.subr.bf16.mxu0 0
    %300 = vmatpush1.bf16.msra.mxu0 0
    %301 = vmatprep.subr.bf16.mxu0 0
    %302 = vmatpush1.bf16.msra.mxu0 %v198
    %303 = vmatprep.subr.bf16.mxu0 0
    %304 = vmatpush1.bf16.msra.mxu0 %v197
    %305 = vmatprep.subr.bf16.mxu0 0
    %306 = vmatpush2.bf16.msra.mxu0 0
    %307 = vmatprep.subr.bf16.mxu0 0
    %308 = vmatpush2.bf16.msra.mxu0 0
    %309 = vmatprep.subr.bf16.mxu0 0
    %310 = vmatpush2.bf16.msra.mxu0 0
    %311 = vmatprep.subr.bf16.mxu0 0
    %312 = vmatpush2.bf16.msra.mxu0 0
    %313 = vmatprep.subr.bf16.mxu0 0
    %314 = vmatpush2.bf16.msra.mxu0 0
    %315 = vmatprep.subr.bf16.mxu0 0
    %316 = vmatpush2.bf16.msra.mxu0 0
    %317 = vmatprep.subr.bf16.mxu0 0
    %318 = vmatpush2.bf16.msra.mxu0 0
    %319 = vmatprep.subr.bf16.mxu0 0
    %320 = vmatpush2.bf16.msra.mxu0 0
    %321 = vmatprep.mubr.bf16.mxu0 0
    %322 = vmatmul.mubr.bf16.gmra.mxu0 %v287
    %v323 = vpop.f32.mrf.mxu0
    %v324 = vadd.f32 0.0, %v323
    %v325 = vpop.f32.mrf.mxu0
    %v326 = vpop.f32.mrf.mxu0
    %v327 = vpop.f32.mrf.mxu0
    %328 = vdwg.mxu0
    %v329 = vadd.f32 %v283, %v324
    %v330 = vxor.u32 %v329, 2147483648
    %v331 = vmul.f32 %v330, 1.442695
    %v332 = vpow.pop %v331
    %v333 = vadd.f32 %v332, 1.0
    %v334 = vrcp.pop %v333
    %v335 = vmul.f32 1.0, %v334
    %v336 = vtanh.pop %v329
    %v337 = vmul.f32 %v335, %v266
    %339 = vrot.lane.b32.xlu0 %v336, 32
    %v340 = vpop.permute.xlu0 %339
    %v342 = vmul.f32 %v335, %v340
    %344 = vrot.lane.b32.xlu0 %v342, 32
    %v345 = vpop.permute.xlu0 %344
    %v347 = vadd.f32 %v337, %v345
    %v348 = vtanh.pop %v347
    %350 = vrot.lane.b32.xlu0 %v348, 32
    %v351 = vpop.permute.xlu0 %350
    %v353 = vmul.f32 %v335, %v351
    %v354 = vpack.c.bf16 %v353, %v353
    %v356 = vunpack.c.l.b16 %v354
    %v357 = vpack.c.b16 %v356, %v356
    %358 = vrot.lane.b32.xlu0 %v357, 64
    %v359 = vpop.permute.xlu0 %358
    %s361 = scalar_lea.vmem [#allocation3], 4
    %362 = vst.msk [vmem:[%s361] sm:$0xf] %vm280, %v359
    %s363 = scalar_lea.vmem [#allocation2], 16
    %v364 = vld [vmem:[%s363] sm:$0xff]
    %365 = vrot.lane.b32.xlu0 %v354, 64
    %v366 = vpop.permute.xlu0 %365
    %v368 = vsel %vm99, %v366, 0
    %370 = vmatprep.subr.bf16.mxu0 0
    %371 = vmatpush1.bf16.msra.mxu0 0
    %372 = vmatprep.subr.bf16.mxu0 0
    %373 = vmatpush1.bf16.msra.mxu0 0
    %374 = vmatprep.subr.bf16.mxu0 0
    %375 = vmatpush1.bf16.msra.mxu0 0
    %376 = vmatprep.subr.bf16.mxu0 0
    %377 = vmatpush1.bf16.msra.mxu0 0
    %378 = vmatprep.subr.bf16.mxu0 0
    %379 = vmatpush1.bf16.msra.mxu0 0
    %380 = vmatprep.subr.bf16.mxu0 0
    %381 = vmatpush1.bf16.msra.mxu0 0
    %382 = vmatprep.subr.bf16.mxu0 0
    %383 = vmatpush1.bf16.msra.mxu0 %v198
    %384 = vmatprep.subr.bf16.mxu0 0
    %385 = vmatpush1.bf16.msra.mxu0 %v197
    %386 = vmatprep.subr.bf16.mxu0 0
    %387 = vmatpush2.bf16.msra.mxu0 0
    %388 = vmatprep.subr.bf16.mxu0 0
    %389 = vmatpush2.bf16.msra.mxu0 0
    %390 = vmatprep.subr.bf16.mxu0 0
    %391 = vmatpush2.bf16.msra.mxu0 0
    %392 = vmatprep.subr.bf16.mxu0 0
    %393 = vmatpush2.bf16.msra.mxu0 0
    %394 = vmatprep.subr.bf16.mxu0 0
    %395 = vmatpush2.bf16.msra.mxu0 0
    %396 = vmatprep.subr.bf16.mxu0 0
    %397 = vmatpush2.bf16.msra.mxu0 0
    %398 = vmatprep.subr.bf16.mxu0 0
    %399 = vmatpush2.bf16.msra.mxu0 0
    %400 = vmatprep.subr.bf16.mxu0 0
    %401 = vmatpush2.bf16.msra.mxu0 0
    %402 = vmatprep.mubr.bf16.mxu0 0
    %403 = vmatmul.mubr.bf16.gmra.mxu0 %v368
    %v404 = vpop.f32.mrf.mxu0
    %v405 = vadd.f32 0.0, %v404
    %v406 = vpop.f32.mrf.mxu0
    %v407 = vpop.f32.mrf.mxu0
    %v408 = vpop.f32.mrf.mxu0
    %409 = vdwg.mxu0
    %v410 = vadd.f32 %v364, %v405
    %v411 = vxor.u32 %v410, 2147483648
    %v412 = vmul.f32 %v411, 1.442695
    %v413 = vpow.pop %v412
    %v414 = vadd.f32 %v413, 1.0
    %v415 = vrcp.pop %v414
    %v416 = vmul.f32 1.0, %v415
    %v417 = vtanh.pop %v410
    %v418 = vmul.f32 %v416, %v347
    %420 = vrot.lane.b32.xlu0 %v417, 32
    %v421 = vpop.permute.xlu0 %420
    %v423 = vmul.f32 %v416, %v421
    %425 = vrot.lane.b32.xlu0 %v423, 32
    %v426 = vpop.permute.xlu0 %425
    %v428 = vadd.f32 %v418, %v426
    %v429 = vtanh.pop %v428
    %431 = vrot.lane.b32.xlu0 %v429, 32
    %v432 = vpop.permute.xlu0 %431
    %v434 = vmul.f32 %v416, %v432
    %v435 = vpack.c.bf16 %v434, %v434
    %v437 = vunpack.c.l.b16 %v435
    %v438 = vpack.c.b16 %v437, %v437
    %439 = vrot.lane.b32.xlu0 %v438, 64
    %v440 = vpop.permute.xlu0 %439
    %s442 = scalar_lea.vmem [#allocation3], 8
    %443 = vst.msk [vmem:[%s442] sm:$0xf] %vm280, %v440
    %s444 = scalar_lea.vmem [#allocation2], 24
    %v445 = vld [vmem:[%s444] sm:$0xff]
    %446 = vrot.lane.b32.xlu0 %v435, 64
    %v447 = vpop.permute.xlu0 %446
    %v449 = vsel %vm99, %v447, 0
    %451 = vmatprep.subr.bf16.mxu0 0
    %452 = vmatpush1.bf16.msra.mxu0 0
    %453 = vmatprep.subr.bf16.mxu0 0
    %454 = vmatpush1.bf16.msra.mxu0 0
    %455 = vmatprep.subr.bf16.mxu0 0
    %456 = vmatpush1.bf16.msra.mxu0 0
    %457 = vmatprep.subr.bf16.mxu0 0
    %458 = vmatpush1.bf16.msra.mxu0 0
    %459 = vmatprep.subr.bf16.mxu0 0
    %460 = vmatpush1.bf16.msra.mxu0 0
    %461 = vmatprep.subr.bf16.mxu0 0
    %462 = vmatpush1.bf16.msra.mxu0 0
    %463 = vmatprep.subr.bf16.mxu0 0
    %464 = vmatpush1.bf16.msra.mxu0 %v198
    %465 = vmatprep.subr.bf16.mxu0 0
    %466 = vmatpush1.bf16.msra.mxu0 %v197
    %467 = vmatprep.subr.bf16.mxu0 0
    %468 = vmatpush2.bf16.msra.mxu0 0
    %469 = vmatprep.subr.bf16.mxu0 0
    %470 = vmatpush2.bf16.msra.mxu0 0
    %471 = vmatprep.subr.bf16.mxu0 0
    %472 = vmatpush2.bf16.msra.mxu0 0
    %473 = vmatprep.subr.bf16.mxu0 0
    %474 = vmatpush2.bf16.msra.mxu0 0
    %475 = vmatprep.subr.bf16.mxu0 0
    %476 = vmatpush2.bf16.msra.mxu0 0
    %477 = vmatprep.subr.bf16.mxu0 0
    %478 = vmatpush2.bf16.msra.mxu0 0
    %479 = vmatprep.subr.bf16.mxu0 0
    %480 = vmatpush2.bf16.msra.mxu0 0
    %481 = vmatprep.subr.bf16.mxu0 0
    %482 = vmatpush2.bf16.msra.mxu0 0
    %483 = vmatprep.mubr.bf16.mxu0 0
    %484 = vmatmul.mubr.bf16.gmra.mxu0 %v449
    %v485 = vpop.f32.mrf.mxu0
    %v486 = vadd.f32 0.0, %v485
    %v487 = vpop.f32.mrf.mxu0
    %v488 = vpop.f32.mrf.mxu0
    %v489 = vpop.f32.mrf.mxu0
    %490 = vdwg.mxu0
    %v491 = vadd.f32 %v445, %v486
    %v492 = vxor.u32 %v491, 2147483648
    %v493 = vmul.f32 %v492, 1.442695
    %v494 = vpow.pop %v493
    %v495 = vadd.f32 %v494, 1.0
    %v496 = vrcp.pop %v495
    %v497 = vmul.f32 1.0, %v496
    %v498 = vtanh.pop %v491
    %v499 = vmul.f32 %v497, %v428
    %501 = vrot.lane.b32.xlu0 %v498, 32
    %v502 = vpop.permute.xlu0 %501
    %v504 = vmul.f32 %v497, %v502
    %506 = vrot.lane.b32.xlu0 %v504, 32
    %v507 = vpop.permute.xlu0 %506
    %v509 = vadd.f32 %v499, %v507
    %v510 = vtanh.pop %v509
    %512 = vrot.lane.b32.xlu0 %v510, 32
    %v513 = vpop.permute.xlu0 %512
    %v515 = vmul.f32 %v497, %v513
    %v516 = vpack.c.bf16 %v515, %v515
    %v518 = vunpack.c.l.b16 %v516
    %v519 = vpack.c.b16 %v518, %v518
    %520 = vrot.lane.b32.xlu0 %v519, 64
    %v521 = vpop.permute.xlu0 %520
    %s523 = scalar_lea.vmem [#allocation3], 12
    %524 = vst.msk [vmem:[%s523] sm:$0xf] %vm280, %v521
    %s525 = scalar_lea.vmem [#allocation2], 32
    %v526 = vld [vmem:[%s525] sm:$0xff]
    %527 = vrot.lane.b32.xlu0 %v516, 64
    %v528 = vpop.permute.xlu0 %527
    %v530 = vsel %vm99, %v528, 0
    %532 = vmatprep.subr.bf16.mxu0 0
    %533 = vmatpush1.bf16.msra.mxu0 0
    %534 = vmatprep.subr.bf16.mxu0 0
    %535 = vmatpush1.bf16.msra.mxu0 0
    %536 = vmatprep.subr.bf16.mxu0 0
    %537 = vmatpush1.bf16.msra.mxu0 0
    %538 = vmatprep.subr.bf16.mxu0 0
    %539 = vmatpush1.bf16.msra.mxu0 0
    %540 = vmatprep.subr.bf16.mxu0 0
    %541 = vmatpush1.bf16.msra.mxu0 0
    %542 = vmatprep.subr.bf16.mxu0 0
    %543 = vmatpush1.bf16.msra.mxu0 0
    %544 = vmatprep.subr.bf16.mxu0 0
    %545 = vmatpush1.bf16.msra.mxu0 %v198
    %546 = vmatprep.subr.bf16.mxu0 0
    %547 = vmatpush1.bf16.msra.mxu0 %v197
    %548 = vmatprep.subr.bf16.mxu0 0
    %549 = vmatpush2.bf16.msra.mxu0 0
    %550 = vmatprep.subr.bf16.mxu0 0
    %551 = vmatpush2.bf16.msra.mxu0 0
    %552 = vmatprep.subr.bf16.mxu0 0
    %553 = vmatpush2.bf16.msra.mxu0 0
    %554 = vmatprep.subr.bf16.mxu0 0
    %555 = vmatpush2.bf16.msra.mxu0 0
    %556 = vmatprep.subr.bf16.mxu0 0
    %557 = vmatpush2.bf16.msra.mxu0 0
    %558 = vmatprep.subr.bf16.mxu0 0
    %559 = vmatpush2.bf16.msra.mxu0 0
    %560 = vmatprep.subr.bf16.mxu0 0
    %561 = vmatpush2.bf16.msra.mxu0 0
    %562 = vmatprep.subr.bf16.mxu0 0
    %563 = vmatpush2.bf16.msra.mxu0 0
    %564 = vmatprep.mubr.bf16.mxu0 0
    %565 = vmatmul.mubr.bf16.gmra.mxu0 %v530
    %v566 = vpop.f32.mrf.mxu0
    %v567 = vadd.f32 0.0, %v566
    %v568 = vpop.f32.mrf.mxu0
    %v569 = vpop.f32.mrf.mxu0
    %v570 = vpop.f32.mrf.mxu0
    %571 = vdwg.mxu0
    %v572 = vadd.f32 %v526, %v567
    %v573 = vxor.u32 %v572, 2147483648
    %v574 = vmul.f32 %v573, 1.442695
    %v575 = vpow.pop %v574
    %v576 = vadd.f32 %v575, 1.0
    %v577 = vrcp.pop %v576
    %v578 = vmul.f32 1.0, %v577
    %v579 = vtanh.pop %v572
    %v580 = vmul.f32 %v578, %v509
    %582 = vrot.lane.b32.xlu0 %v579, 32
    %v583 = vpop.permute.xlu0 %582
    %v585 = vmul.f32 %v578, %v583
    %587 = vrot.lane.b32.xlu0 %v585, 32
    %v588 = vpop.permute.xlu0 %587
    %v590 = vadd.f32 %v580, %v588
    %v591 = vtanh.pop %v590
    %593 = vrot.lane.b32.xlu0 %v591, 32
    %v594 = vpop.permute.xlu0 %593
    %v596 = vmul.f32 %v578, %v594
    %v597 = vpack.c.bf16 %v596, %v596
    %v599 = vunpack.c.l.b16 %v597
    %v600 = vpack.c.b16 %v599, %v599
    %601 = vrot.lane.b32.xlu0 %v600, 64
    %v602 = vpop.permute.xlu0 %601
    %s604 = scalar_lea.vmem [#allocation3], 16
    %605 = vst.msk [vmem:[%s604] sm:$0xf] %vm280, %v602
    %s606 = scalar_lea.vmem [#allocation2], 40
    %v607 = vld [vmem:[%s606] sm:$0xff]
    %608 = vrot.lane.b32.xlu0 %v597, 64
    %v609 = vpop.permute.xlu0 %608
    %v611 = vsel %vm99, %v609, 0
    %613 = vmatprep.subr.bf16.mxu0 0
    %614 = vmatpush1.bf16.msra.mxu0 0
    %615 = vmatprep.subr.bf16.mxu0 0
    %616 = vmatpush1.bf16.msra.mxu0 0
    %617 = vmatprep.subr.bf16.mxu0 0
    %618 = vmatpush1.bf16.msra.mxu0 0
    %619 = vmatprep.subr.bf16.mxu0 0
    %620 = vmatpush1.bf16.msra.mxu0 0
    %621 = vmatprep.subr.bf16.mxu0 0
    %622 = vmatpush1.bf16.msra.mxu0 0
    %623 = vmatprep.subr.bf16.mxu0 0
    %624 = vmatpush1.bf16.msra.mxu0 0
    %625 = vmatprep.subr.bf16.mxu0 0
    %626 = vmatpush1.bf16.msra.mxu0 %v198
    %627 = vmatprep.subr.bf16.mxu0 0
    %628 = vmatpush1.bf16.msra.mxu0 %v197
    %629 = vmatprep.subr.bf16.mxu0 0
    %630 = vmatpush2.bf16.msra.mxu0 0
    %631 = vmatprep.subr.bf16.mxu0 0
    %632 = vmatpush2.bf16.msra.mxu0 0
    %633 = vmatprep.subr.bf16.mxu0 0
    %634 = vmatpush2.bf16.msra.mxu0 0
    %635 = vmatprep.subr.bf16.mxu0 0
    %636 = vmatpush2.bf16.msra.mxu0 0
    %637 = vmatprep.subr.bf16.mxu0 0
    %638 = vmatpush2.bf16.msra.mxu0 0
    %639 = vmatprep.subr.bf16.mxu0 0
    %640 = vmatpush2.bf16.msra.mxu0 0
    %641 = vmatprep.subr.bf16.mxu0 0
    %642 = vmatpush2.bf16.msra.mxu0 0
    %643 = vmatprep.subr.bf16.mxu0 0
    %644 = vmatpush2.bf16.msra.mxu0 0
    %645 = vmatprep.mubr.bf16.mxu0 0
    %646 = vmatmul.mubr.bf16.gmra.mxu0 %v611
    %v647 = vpop.f32.mrf.mxu0
    %v648 = vadd.f32 0.0, %v647
    %v649 = vpop.f32.mrf.mxu0
    %v650 = vpop.f32.mrf.mxu0
    %v651 = vpop.f32.mrf.mxu0
    %652 = vdwg.mxu0
    %v653 = vadd.f32 %v607, %v648
    %v654 = vxor.u32 %v653, 2147483648
    %v655 = vmul.f32 %v654, 1.442695
    %v656 = vpow.pop %v655
    %v657 = vadd.f32 %v656, 1.0
    %v658 = vrcp.pop %v657
    %v659 = vmul.f32 1.0, %v658
    %v660 = vtanh.pop %v653
    %v661 = vmul.f32 %v659, %v590
    %663 = vrot.lane.b32.xlu0 %v660, 32
    %v664 = vpop.permute.xlu0 %663
    %v666 = vmul.f32 %v659, %v664
    %668 = vrot.lane.b32.xlu0 %v666, 32
    %v669 = vpop.permute.xlu0 %668
    %v671 = vadd.f32 %v661, %v669
    %v672 = vtanh.pop %v671
    %674 = vrot.lane.b32.xlu0 %v672, 32
    %v675 = vpop.permute.xlu0 %674
    %v677 = vmul.f32 %v659, %v675
    %v678 = vpack.c.bf16 %v677, %v677
    %v680 = vunpack.c.l.b16 %v678
    %v681 = vpack.c.b16 %v680, %v680
    %682 = vrot.lane.b32.xlu0 %v681, 64
    %v683 = vpop.permute.xlu0 %682
    %s685 = scalar_lea.vmem [#allocation3], 20
    %686 = vst.msk [vmem:[%s685] sm:$0xf] %vm280, %v683
    %s687 = scalar_lea.vmem [#allocation2], 48
    %v688 = vld [vmem:[%s687] sm:$0xff]
    %689 = vrot.lane.b32.xlu0 %v678, 64
    %v690 = vpop.permute.xlu0 %689
    %v692 = vsel %vm99, %v690, 0
    %694 = vmatprep.subr.bf16.mxu0 0
    %695 = vmatpush1.bf16.msra.mxu0 0
    %696 = vmatprep.subr.bf16.mxu0 0
    %697 = vmatpush1.bf16.msra.mxu0 0
    %698 = vmatprep.subr.bf16.mxu0 0
    %699 = vmatpush1.bf16.msra.mxu0 0
    %700 = vmatprep.subr.bf16.mxu0 0
    %701 = vmatpush1.bf16.msra.mxu0 0
    %702 = vmatprep.subr.bf16.mxu0 0
    %703 = vmatpush1.bf16.msra.mxu0 0
    %704 = vmatprep.subr.bf16.mxu0 0
    %705 = vmatpush1.bf16.msra.mxu0 0
    %706 = vmatprep.subr.bf16.mxu0 0
    %707 = vmatpush1.bf16.msra.mxu0 %v198
    %708 = vmatprep.subr.bf16.mxu0 0
    %709 = vmatpush1.bf16.msra.mxu0 %v197
    %710 = vmatprep.subr.bf16.mxu0 0
    %711 = vmatpush2.bf16.msra.mxu0 0
    %712 = vmatprep.subr.bf16.mxu0 0
    %713 = vmatpush2.bf16.msra.mxu0 0
    %714 = vmatprep.subr.bf16.mxu0 0
    %715 = vmatpush2.bf16.msra.mxu0 0
    %716 = vmatprep.subr.bf16.mxu0 0
    %717 = vmatpush2.bf16.msra.mxu0 0
    %718 = vmatprep.subr.bf16.mxu0 0
    %719 = vmatpush2.bf16.msra.mxu0 0
    %720 = vmatprep.subr.bf16.mxu0 0
    %721 = vmatpush2.bf16.msra.mxu0 0
    %722 = vmatprep.subr.bf16.mxu0 0
    %723 = vmatpush2.bf16.msra.mxu0 0
    %724 = vmatprep.subr.bf16.mxu0 0
    %725 = vmatpush2.bf16.msra.mxu0 0
    %726 = vmatprep.mubr.bf16.mxu0 0
    %727 = vmatmul.mubr.bf16.gmra.mxu0 %v692
    %v728 = vpop.f32.mrf.mxu0
    %v729 = vadd.f32 0.0, %v728
    %v730 = vpop.f32.mrf.mxu0
    %v731 = vpop.f32.mrf.mxu0
    %v732 = vpop.f32.mrf.mxu0
    %733 = vdwg.mxu0
    %v734 = vadd.f32 %v688, %v729
    %v735 = vxor.u32 %v734, 2147483648
    %v736 = vmul.f32 %v735, 1.442695
    %v737 = vpow.pop %v736
    %v738 = vadd.f32 %v737, 1.0
    %v739 = vrcp.pop %v738
    %v740 = vmul.f32 1.0, %v739
    %v741 = vtanh.pop %v734
    %v742 = vmul.f32 %v740, %v671
    %744 = vrot.lane.b32.xlu0 %v741, 32
    %v745 = vpop.permute.xlu0 %744
    %v747 = vmul.f32 %v740, %v745
    %749 = vrot.lane.b32.xlu0 %v747, 32
    %v750 = vpop.permute.xlu0 %749
    %v752 = vadd.f32 %v742, %v750
    %v753 = vtanh.pop %v752
    %755 = vrot.lane.b32.xlu0 %v753, 32
    %v756 = vpop.permute.xlu0 %755
    %v758 = vmul.f32 %v740, %v756
    %v759 = vpack.c.bf16 %v758, %v758
    %v761 = vunpack.c.l.b16 %v759
    %v762 = vpack.c.b16 %v761, %v761
    %763 = vrot.lane.b32.xlu0 %v762, 64
    %v764 = vpop.permute.xlu0 %763
    %s766 = scalar_lea.vmem [#allocation3], 24
    %767 = vst.msk [vmem:[%s766] sm:$0xf] %vm280, %v764
    %s768 = scalar_lea.vmem [#allocation2], 56
    %v769 = vld [vmem:[%s768] sm:$0xff]
    %770 = vrot.lane.b32.xlu0 %v759, 64
    %v771 = vpop.permute.xlu0 %770
    %v773 = vsel %vm99, %v771, 0
    %775 = vmatprep.subr.bf16.mxu0 0
    %776 = vmatpush1.bf16.msra.mxu0 0
    %777 = vmatprep.subr.bf16.mxu0 0
    %778 = vmatpush1.bf16.msra.mxu0 0
    %779 = vmatprep.subr.bf16.mxu0 0
    %780 = vmatpush1.bf16.msra.mxu0 0
    %781 = vmatprep.subr.bf16.mxu0 0
    %782 = vmatpush1.bf16.msra.mxu0 0
    %783 = vmatprep.subr.bf16.mxu0 0
    %784 = vmatpush1.bf16.msra.mxu0 0
    %785 = vmatprep.subr.bf16.mxu0 0
    %786 = vmatpush1.bf16.msra.mxu0 0
    %787 = vmatprep.subr.bf16.mxu0 0
    %788 = vmatpush1.bf16.msra.mxu0 %v198
    %789 = vmatprep.subr.bf16.mxu0 0
    %790 = vmatpush1.bf16.msra.mxu0 %v197
    %791 = vmatprep.subr.bf16.mxu0 0
    %792 = vmatpush2.bf16.msra.mxu0 0
    %793 = vmatprep.subr.bf16.mxu0 0
    %794 = vmatpush2.bf16.msra.mxu0 0
    %795 = vmatprep.subr.bf16.mxu0 0
    %796 = vmatpush2.bf16.msra.mxu0 0
    %797 = vmatprep.subr.bf16.mxu0 0
    %798 = vmatpush2.bf16.msra.mxu0 0
    %799 = vmatprep.subr.bf16.mxu0 0
    %800 = vmatpush2.bf16.msra.mxu0 0
    %801 = vmatprep.subr.bf16.mxu0 0
    %802 = vmatpush2.bf16.msra.mxu0 0
    %803 = vmatprep.subr.bf16.mxu0 0
    %804 = vmatpush2.bf16.msra.mxu0 0
    %805 = vmatprep.subr.bf16.mxu0 0
    %806 = vmatpush2.bf16.msra.mxu0 0
    %807 = vmatprep.mubr.bf16.mxu0 0
    %808 = vmatmul.mubr.bf16.gmra.mxu0 %v773
    %v809 = vpop.f32.mrf.mxu0
    %v810 = vadd.f32 0.0, %v809
    %v811 = vpop.f32.mrf.mxu0
    %v812 = vpop.f32.mrf.mxu0
    %v813 = vpop.f32.mrf.mxu0
    %814 = vdwg.mxu0
    %v815 = vadd.f32 %v769, %v810
    %v816 = vxor.u32 %v815, 2147483648
    %v817 = vmul.f32 %v816, 1.442695
    %v818 = vpow.pop %v817
    %v819 = vadd.f32 %v818, 1.0
    %v820 = vrcp.pop %v819
    %v821 = vmul.f32 1.0, %v820
    %v822 = vtanh.pop %v815
    %v823 = vmul.f32 %v821, %v752
    %825 = vrot.lane.b32.xlu0 %v822, 32
    %v826 = vpop.permute.xlu0 %825
    %v828 = vmul.f32 %v821, %v826
    %830 = vrot.lane.b32.xlu0 %v828, 32
    %v831 = vpop.permute.xlu0 %830
    %v833 = vadd.f32 %v823, %v831
    %v834 = vtanh.pop %v833
    %836 = vrot.lane.b32.xlu0 %v834, 32
    %v837 = vpop.permute.xlu0 %836
    %v839 = vmul.f32 %v821, %v837
    %v840 = vpack.c.bf16 %v839, %v839
    %v842 = vunpack.c.l.b16 %v840
    %v843 = vpack.c.b16 %v842, %v842
    %844 = vrot.lane.b32.xlu0 %v843, 64
    %v845 = vpop.permute.xlu0 %844
    %s847 = scalar_lea.vmem [#allocation3], 28
    %848 = vst.msk [vmem:[%s847] sm:$0xf] %vm280, %v845
    %850 = vrot.lane.b32.xlu0 %v839, 64
    %v851 = vpop.permute.xlu0 %850
    %853 = vst.msk [vmem:[#allocation4] sm:$0xff] %vm99, %v851
    %855 = vrot.lane.b32.xlu0 %v833, 96
    %v856 = vpop.permute.xlu0 %855
    %858 = vst.msk [vmem:[#allocation6] sm:$0xff] %vm99, %v856
    %v859 = vld [vmem:[#allocation3] sm:$0xf]
    %v860 = vld [vmem:[#allocation3 + $0x4] sm:$0xf]
    %v861 = vld [vmem:[#allocation3 + $0x8] sm:$0xf]
    %v862 = vld [vmem:[#allocation3 + $0xc] sm:$0xf]
    %v863 = vld [vmem:[#allocation3 + $0x10] sm:$0xf]
    %v864 = vld [vmem:[#allocation3 + $0x14] sm:$0xf]
    %v865 = vld [vmem:[#allocation3 + $0x18] sm:$0xf]
    %v866 = vld [vmem:[#allocation3 + $0x1c] sm:$0xf]
    %v867 = vld [vmem:[%s6] sm:$0xf]
    %v868 = vld [vmem:[%s6 + $0x4] sm:$0xf]
    %v869 = vld [vmem:[%s6 + $0x8] sm:$0xf]
    %v870 = vld [vmem:[%s6 + $0xc] sm:$0xf]
    %v871 = vld [vmem:[%s7] sm:$0xf]
    %v872 = vld [vmem:[%s7 + $0x4] sm:$0xf]
    %v873 = vld [vmem:[%s7 + $0x8] sm:$0xf]
    %v874 = vld [vmem:[%s7 + $0xc] sm:$0xf]
    %v875 = vld [vmem:[%s8] sm:$0x1]
    %v877 = vlaneseq
    %v878 = vshrl.u32 %v877, 7
    %v879 = vsub.s32 0, %v878
    %v880 = vrot.slane %v875, %v879
    %v890 = vunpack.c.l.b16 %v859
    %v891 = vunpack.c.l.b16 %v860
    %v892 = vunpack.c.l.b16 %v861
    %v893 = vunpack.c.l.b16 %v862
    %v894 = vunpack.c.l.b16 %v863
    %v895 = vunpack.c.l.b16 %v864
    %v896 = vunpack.c.l.b16 %v865
    %v897 = vunpack.c.l.b16 %v866
    %v898 = vpack.c.b16 %v891, %v890
    %v899 = vpack.c.b16 %v893, %v892
    %v900 = vpack.c.b16 %v895, %v894
    %v901 = vpack.c.b16 %v897, %v896
    %v906 = vunpack.c.l.b16 %v867
    %v907 = vunpack.c.l.b16 %v868
    %v908 = vunpack.c.l.b16 %v869
    %v909 = vunpack.c.l.b16 %v870
    %v910 = vpack.c.b16 %v907, %v906
    %v911 = vpack.c.b16 %v909, %v908
    %v915 = vsel %vm99, %v898, 0
    %v918 = vsel %vm99, %v899, 0
    %v921 = vsel %vm99, %v900, 0
    %v924 = vsel %vm99, %v901, 0
    %926 = vmatprep.subr.bf16.mxu0 0
    %927 = vmatpush1.bf16.msra.mxu0 0
    %928 = vmatprep.subr.bf16.mxu0 0
    %929 = vmatpush1.bf16.msra.mxu0 0
    %930 = vmatprep.subr.bf16.mxu0 0
    %931 = vmatpush1.bf16.msra.mxu0 0
    %932 = vmatprep.subr.bf16.mxu0 0
    %933 = vmatpush1.bf16.msra.mxu0 0
    %934 = vmatprep.subr.bf16.mxu0 0
    %935 = vmatpush1.bf16.msra.mxu0 0
    %936 = vmatprep.subr.bf16.mxu0 0
    %937 = vmatpush1.bf16.msra.mxu0 0
    %938 = vmatprep.subr.bf16.mxu0 0
    %939 = vmatpush1.bf16.msra.mxu0 %v911
    %940 = vmatprep.subr.bf16.mxu0 0
    %941 = vmatpush1.bf16.msra.mxu0 %v910
    %942 = vmatprep.subr.bf16.mxu0 0
    %943 = vmatpush2.bf16.msra.mxu0 0
    %944 = vmatprep.subr.bf16.mxu0 0
    %945 = vmatpush2.bf16.msra.mxu0 0
    %946 = vmatprep.subr.bf16.mxu0 0
    %947 = vmatpush2.bf16.msra.mxu0 0
    %948 = vmatprep.subr.bf16.mxu0 0
    %949 = vmatpush2.bf16.msra.mxu0 0
    %950 = vmatprep.subr.bf16.mxu0 0
    %951 = vmatpush2.bf16.msra.mxu0 0
    %952 = vmatprep.subr.bf16.mxu0 0
    %953 = vmatpush2.bf16.msra.mxu0 0
    %954 = vmatprep.subr.bf16.mxu0 0
    %955 = vmatpush2.bf16.msra.mxu0 0
    %956 = vmatprep.subr.bf16.mxu0 0
    %957 = vmatpush2.bf16.msra.mxu0 0
    %958 = vmatprep.mubr.bf16.mxu0 0
    %959 = vmatmul.mubr.bf16.gmra.mxu0 %v915
    %v960 = vpop.f32.mrf.mxu0
    %v961 = vadd.f32 %v880, %v960
    %v962 = vpop.f32.mrf.mxu0
    %v963 = vpop.f32.mrf.mxu0
    %v964 = vadd.f32 %v880, %v963
    %v965 = vpop.f32.mrf.mxu0
    %966 = vmatprep.mubr.bf16.mxu0 0
    %967 = vmatmul.mubr.bf16.gmra.mxu0 %v918
    %v968 = vpop.f32.mrf.mxu0
    %v969 = vadd.f32 %v880, %v968
    %v970 = vpop.f32.mrf.mxu0
    %v971 = vpop.f32.mrf.mxu0
    %v972 = vadd.f32 %v880, %v971
    %v973 = vpop.f32.mrf.mxu0
    %974 = vmatprep.mubr.bf16.mxu0 0
    %975 = vmatmul.mubr.bf16.gmra.mxu0 %v921
    %v976 = vpop.f32.mrf.mxu0
    %v977 = vadd.f32 %v880, %v976
    %v978 = vpop.f32.mrf.mxu0
    %v979 = vpop.f32.mrf.mxu0
    %v980 = vadd.f32 %v880, %v979
    %v981 = vpop.f32.mrf.mxu0
    %982 = vmatprep.mubr.bf16.mxu0 0
    %983 = vmatmul.mubr.bf16.gmra.mxu0 %v924
    %v984 = vpop.f32.mrf.mxu0
    %v985 = vadd.f32 %v880, %v984
    %v986 = vpop.f32.mrf.mxu0
    %v987 = vpop.f32.mrf.mxu0
    %v988 = vadd.f32 %v880, %v987
    %v989 = vpop.f32.mrf.mxu0
    %990 = vdwg.mxu0
    %991 = vst [vmem:[#allocation2] sm:$0xff] %v961
    %992 = vst [vmem:[#allocation2 + $0x8] sm:$0xff] %v964
    %993 = vst [vmem:[#allocation2 + $0x10] sm:$0xff] %v969
    %994 = vst [vmem:[#allocation2 + $0x18] sm:$0xff] %v972
    %995 = vst [vmem:[#allocation2 + $0x20] sm:$0xff] %v977
    %996 = vst [vmem:[#allocation2 + $0x28] sm:$0xff] %v980
    %997 = vst [vmem:[#allocation2 + $0x30] sm:$0xff] %v985
    %998 = vst [vmem:[#allocation2 + $0x38] sm:$0xff] %v988
    %s999 = scalar_lea.vmem %s1, 8
    %v1000 = vld [vmem:[%s999] sm:$0xff]
    %s1001 = scalar_lea.vmem %s2, 8
    %v1002 = vld [vmem:[%s1001] sm:$0xff]
    %v1003 = vld [vmem:[#allocation2] sm:$0xff]
    %v1004 = vpack.c.bf16 %v1000, %v1000
    %v1009 = vunpack.c.l.b16 %v871
    %v1010 = vunpack.c.l.b16 %v872
    %v1011 = vunpack.c.l.b16 %v873
    %v1012 = vunpack.c.l.b16 %v874
    %v1013 = vpack.c.b16 %v1010, %v1009
    %v1014 = vpack.c.b16 %v1012, %v1011
    %v1018 = vsel %vm99, %v1004, 0
    %1020 = vmatprep.subr.bf16.mxu0 0
    %1021 = vmatpush1.bf16.msra.mxu0 0
    %1022 = vmatprep.subr.bf16.mxu0 0
    %1023 = vmatpush1.bf16.msra.mxu0 0
    %1024 = vmatprep.subr.bf16.mxu0 0
    %1025 = vmatpush1.bf16.msra.mxu0 0
    %1026 = vmatprep.subr.bf16.mxu0 0
    %1027 = vmatpush1.bf16.msra.mxu0 0
    %1028 = vmatprep.subr.bf16.mxu0 0
    %1029 = vmatpush1.bf16.msra.mxu0 0
    %1030 = vmatprep.subr.bf16.mxu0 0
    %1031 = vmatpush1.bf16.msra.mxu0 0
    %1032 = vmatprep.subr.bf16.mxu0 0
    %1033 = vmatpush1.bf16.msra.mxu0 %v1014
    %1034 = vmatprep.subr.bf16.mxu0 0
    %1035 = vmatpush1.bf16.msra.mxu0 %v1013
    %1036 = vmatprep.subr.bf16.mxu0 0
    %1037 = vmatpush2.bf16.msra.mxu0 0
    %1038 = vmatprep.subr.bf16.mxu0 0
    %1039 = vmatpush2.bf16.msra.mxu0 0
    %1040 = vmatprep.subr.bf16.mxu0 0
    %1041 = vmatpush2.bf16.msra.mxu0 0
    %1042 = vmatprep.subr.bf16.mxu0 0
    %1043 = vmatpush2.bf16.msra.mxu0 0
    %1044 = vmatprep.subr.bf16.mxu0 0
    %1045 = vmatpush2.bf16.msra.mxu0 0
    %1046 = vmatprep.subr.bf16.mxu0 0
    %1047 = vmatpush2.bf16.msra.mxu0 0
    %1048 = vmatprep.subr.bf16.mxu0 0
    %1049 = vmatpush2.bf16.msra.mxu0 0
    %1050 = vmatprep.subr.bf16.mxu0 0
    %1051 = vmatpush2.bf16.msra.mxu0 0
    %1052 = vmatprep.mubr.bf16.mxu0 0
    %1053 = vmatmul.mubr.bf16.gmra.mxu0 %v1018
    %v1054 = vpop.f32.mrf.mxu0
    %v1055 = vadd.f32 0.0, %v1054
    %v1056 = vpop.f32.mrf.mxu0
    %v1057 = vpop.f32.mrf.mxu0
    %v1058 = vpop.f32.mrf.mxu0
    %1059 = vdwg.mxu0
    %v1060 = vadd.f32 %v1003, %v1055
    %v1061 = vxor.u32 %v1060, 2147483648
    %v1062 = vmul.f32 %v1061, 1.442695
    %v1063 = vpow.pop %v1062
    %v1064 = vadd.f32 %v1063, 1.0
    %v1065 = vrcp.pop %v1064
    %v1066 = vmul.f32 1.0, %v1065
    %v1067 = vtanh.pop %v1060
    %1069 = vrot.lane.b32.xlu0 %v1002, 32
    %v1070 = vpop.permute.xlu0 %1069
    %v1072 = vmul.f32 %v1066, %v1070
    %1074 = vrot.lane.b32.xlu0 %v1067, 32
    %v1075 = vpop.permute.xlu0 %1074
    %v1077 = vmul.f32 %v1066, %v1075
    %1079 = vrot.lane.b32.xlu0 %v1077, 32
    %v1080 = vpop.permute.xlu0 %1079
    %v1082 = vadd.f32 %v1072, %v1080
    %v1083 = vtanh.pop %v1082
    %1085 = vrot.lane.b32.xlu0 %v1083, 32
    %v1086 = vpop.permute.xlu0 %1085
    %v1088 = vmul.f32 %v1066, %v1086
    %v1089 = vpack.c.bf16 %v1088, %v1088
    %v1091 = vunpack.c.l.b16 %v1089
    %v1092 = vpack.c.b16 %v1091, %v1091
    %1093 = vrot.lane.b32.xlu0 %v1092, 64
    %v1094 = vpop.permute.xlu0 %1093
    %1096 = vst.msk [vmem:[#allocation3] sm:$0xf] %vm280, %v1094
    %v1097 = vld [vmem:[%s282] sm:$0xff]
    %1098 = vrot.lane.b32.xlu0 %v1089, 64
    %v1099 = vpop.permute.xlu0 %1098
    %v1101 = vsel %vm99, %v1099, 0
    %1103 = vmatprep.subr.bf16.mxu0 0
    %1104 = vmatpush1.bf16.msra.mxu0 0
    %1105 = vmatprep.subr.bf16.mxu0 0
    %1106 = vmatpush1.bf16.msra.mxu0 0
    %1107 = vmatprep.subr.bf16.mxu0 0
    %1108 = vmatpush1.bf16.msra.mxu0 0
    %1109 = vmatprep.subr.bf16.mxu0 0
    %1110 = vmatpush1.bf16.msra.mxu0 0
    %1111 = vmatprep.subr.bf16.mxu0 0
    %1112 = vmatpush1.bf16.msra.mxu0 0
    %1113 = vmatprep.subr.bf16.mxu0 0
    %1114 = vmatpush1.bf16.msra.mxu0 0
    %1115 = vmatprep.subr.bf16.mxu0 0
    %1116 = vmatpush1.bf16.msra.mxu0 %v1014
    %1117 = vmatprep.subr.bf16.mxu0 0
    %1118 = vmatpush1.bf16.msra.mxu0 %v1013
    %1119 = vmatprep.subr.bf16.mxu0 0
    %1120 = vmatpush2.bf16.msra.mxu0 0
    %1121 = vmatprep.subr.bf16.mxu0 0
    %1122 = vmatpush2.bf16.msra.mxu0 0
    %1123 = vmatprep.subr.bf16.mxu0 0
    %1124 = vmatpush2.bf16.msra.mxu0 0
    %1125 = vmatprep.subr.bf16.mxu0 0
    %1126 = vmatpush2.bf16.msra.mxu0 0
    %1127 = vmatprep.subr.bf16.mxu0 0
    %1128 = vmatpush2.bf16.msra.mxu0 0
    %1129 = vmatprep.subr.bf16.mxu0 0
    %1130 = vmatpush2.bf16.msra.mxu0 0
    %1131 = vmatprep.subr.bf16.mxu0 0
    %1132 = vmatpush2.bf16.msra.mxu0 0
    %1133 = vmatprep.subr.bf16.mxu0 0
    %1134 = vmatpush2.bf16.msra.mxu0 0
    %1135 = vmatprep.mubr.bf16.mxu0 0
    %1136 = vmatmul.mubr.bf16.gmra.mxu0 %v1101
    %v1137 = vpop.f32.mrf.mxu0
    %v1138 = vadd.f32 0.0, %v1137
    %v1139 = vpop.f32.mrf.mxu0
    %v1140 = vpop.f32.mrf.mxu0
    %v1141 = vpop.f32.mrf.mxu0
    %1142 = vdwg.mxu0
    %v1143 = vadd.f32 %v1097, %v1138
    %v1144 = vxor.u32 %v1143, 2147483648
    %v1145 = vmul.f32 %v1144, 1.442695
    %v1146 = vpow.pop %v1145
    %v1147 = vadd.f32 %v1146, 1.0
    %v1148 = vrcp.pop %v1147
    %v1149 = vmul.f32 1.0, %v1148
    %v1150 = vtanh.pop %v1143
    %v1151 = vmul.f32 %v1149, %v1082
    %1153 = vrot.lane.b32.xlu0 %v1150, 32
    %v1154 = vpop.permute.xlu0 %1153
    %v1156 = vmul.f32 %v1149, %v1154
    %1158 = vrot.lane.b32.xlu0 %v1156, 32
    %v1159 = vpop.permute.xlu0 %1158
    %v1161 = vadd.f32 %v1151, %v1159
    %v1162 = vtanh.pop %v1161
    %1164 = vrot.lane.b32.xlu0 %v1162, 32
    %v1165 = vpop.permute.xlu0 %1164
    %v1167 = vmul.f32 %v1149, %v1165
    %v1168 = vpack.c.bf16 %v1167, %v1167
    %v1170 = vunpack.c.l.b16 %v1168
    %v1171 = vpack.c.b16 %v1170, %v1170
    %1172 = vrot.lane.b32.xlu0 %v1171, 64
    %v1173 = vpop.permute.xlu0 %1172
    %1175 = vst.msk [vmem:[%s361] sm:$0xf] %vm280, %v1173
    %v1176 = vld [vmem:[%s363] sm:$0xff]
    %1177 = vrot.lane.b32.xlu0 %v1168, 64
    %v1178 = vpop.permute.xlu0 %1177
    %v1180 = vsel %vm99, %v1178, 0
    %1182 = vmatprep.subr.bf16.mxu0 0
    %1183 = vmatpush1.bf16.msra.mxu0 0
    %1184 = vmatprep.subr.bf16.mxu0 0
    %1185 = vmatpush1.bf16.msra.mxu0 0
    %1186 = vmatprep.subr.bf16.mxu0 0
    %1187 = vmatpush1.bf16.msra.mxu0 0
    %1188 = vmatprep.subr.bf16.mxu0 0
    %1189 = vmatpush1.bf16.msra.mxu0 0
    %1190 = vmatprep.subr.bf16.mxu0 0
    %1191 = vmatpush1.bf16.msra.mxu0 0
    %1192 = vmatprep.subr.bf16.mxu0 0
    %1193 = vmatpush1.bf16.msra.mxu0 0
    %1194 = vmatprep.subr.bf16.mxu0 0
    %1195 = vmatpush1.bf16.msra.mxu0 %v1014
    %1196 = vmatprep.subr.bf16.mxu0 0
    %1197 = vmatpush1.bf16.msra.mxu0 %v1013
    %1198 = vmatprep.subr.bf16.mxu0 0
    %1199 = vmatpush2.bf16.msra.mxu0 0
    %1200 = vmatprep.subr.bf16.mxu0 0
    %1201 = vmatpush2.bf16.msra.mxu0 0
    %1202 = vmatprep.subr.bf16.mxu0 0
    %1203 = vmatpush2.bf16.msra.mxu0 0
    %1204 = vmatprep.subr.bf16.mxu0 0
    %1205 = vmatpush2.bf16.msra.mxu0 0
    %1206 = vmatprep.subr.bf16.mxu0 0
    %1207 = vmatpush2.bf16.msra.mxu0 0
    %1208 = vmatprep.subr.bf16.mxu0 0
    %1209 = vmatpush2.bf16.msra.mxu0 0
    %1210 = vmatprep.subr.bf16.mxu0 0
    %1211 = vmatpush2.bf16.msra.mxu0 0
    %1212 = vmatprep.subr.bf16.mxu0 0
    %1213 = vmatpush2.bf16.msra.mxu0 0
    %1214 = vmatprep.mubr.bf16.mxu0 0
    %1215 = vmatmul.mubr.bf16.gmra.mxu0 %v1180
    %v1216 = vpop.f32.mrf.mxu0
    %v1217 = vadd.f32 0.0, %v1216
    %v1218 = vpop.f32.mrf.mxu0
    %v1219 = vpop.f32.mrf.mxu0
    %v1220 = vpop.f32.mrf.mxu0
    %1221 = vdwg.mxu0
    %v1222 = vadd.f32 %v1176, %v1217
    %v1223 = vxor.u32 %v1222, 2147483648
    %v1224 = vmul.f32 %v1223, 1.442695
    %v1225 = vpow.pop %v1224
    %v1226 = vadd.f32 %v1225, 1.0
    %v1227 = vrcp.pop %v1226
    %v1228 = vmul.f32 1.0, %v1227
    %v1229 = vtanh.pop %v1222
    %v1230 = vmul.f32 %v1228, %v1161
    %1232 = vrot.lane.b32.xlu0 %v1229, 32
    %v1233 = vpop.permute.xlu0 %1232
    %v1235 = vmul.f32 %v1228, %v1233
    %1237 = vrot.lane.b32.xlu0 %v1235, 32
    %v1238 = vpop.permute.xlu0 %1237
    %v1240 = vadd.f32 %v1230, %v1238
    %v1241 = vtanh.pop %v1240
    %1243 = vrot.lane.b32.xlu0 %v1241, 32
    %v1244 = vpop.permute.xlu0 %1243
    %v1246 = vmul.f32 %v1228, %v1244
    %v1247 = vpack.c.bf16 %v1246, %v1246
    %v1249 = vunpack.c.l.b16 %v1247
    %v1250 = vpack.c.b16 %v1249, %v1249
    %1251 = vrot.lane.b32.xlu0 %v1250, 64
    %v1252 = vpop.permute.xlu0 %1251
    %1254 = vst.msk [vmem:[%s442] sm:$0xf] %vm280, %v1252
    %v1255 = vld [vmem:[%s444] sm:$0xff]
    %1256 = vrot.lane.b32.xlu0 %v1247, 64
    %v1257 = vpop.permute.xlu0 %1256
    %v1259 = vsel %vm99, %v1257, 0
    %1261 = vmatprep.subr.bf16.mxu0 0
    %1262 = vmatpush1.bf16.msra.mxu0 0
    %1263 = vmatprep.subr.bf16.mxu0 0
    %1264 = vmatpush1.bf16.msra.mxu0 0
    %1265 = vmatprep.subr.bf16.mxu0 0
    %1266 = vmatpush1.bf16.msra.mxu0 0
    %1267 = vmatprep.subr.bf16.mxu0 0
    %1268 = vmatpush1.bf16.msra.mxu0 0
    %1269 = vmatprep.subr.bf16.mxu0 0
    %1270 = vmatpush1.bf16.msra.mxu0 0
    %1271 = vmatprep.subr.bf16.mxu0 0
    %1272 = vmatpush1.bf16.msra.mxu0 0
    %1273 = vmatprep.subr.bf16.mxu0 0
    %1274 = vmatpush1.bf16.msra.mxu0 %v1014
    %1275 = vmatprep.subr.bf16.mxu0 0
    %1276 = vmatpush1.bf16.msra.mxu0 %v1013
    %1277 = vmatprep.subr.bf16.mxu0 0
    %1278 = vmatpush2.bf16.msra.mxu0 0
    %1279 = vmatprep.subr.bf16.mxu0 0
    %1280 = vmatpush2.bf16.msra.mxu0 0
    %1281 = vmatprep.subr.bf16.mxu0 0
    %1282 = vmatpush2.bf16.msra.mxu0 0
    %1283 = vmatprep.subr.bf16.mxu0 0
    %1284 = vmatpush2.bf16.msra.mxu0 0
    %1285 = vmatprep.subr.bf16.mxu0 0
    %1286 = vmatpush2.bf16.msra.mxu0 0
    %1287 = vmatprep.subr.bf16.mxu0 0
    %1288 = vmatpush2.bf16.msra.mxu0 0
    %1289 = vmatprep.subr.bf16.mxu0 0
    %1290 = vmatpush2.bf16.msra.mxu0 0
    %1291 = vmatprep.subr.bf16.mxu0 0
    %1292 = vmatpush2.bf16.msra.mxu0 0
    %1293 = vmatprep.mubr.bf16.mxu0 0
    %1294 = vmatmul.mubr.bf16.gmra.mxu0 %v1259
    %v1295 = vpop.f32.mrf.mxu0
    %v1296 = vadd.f32 0.0, %v1295
    %v1297 = vpop.f32.mrf.mxu0
    %v1298 = vpop.f32.mrf.mxu0
    %v1299 = vpop.f32.mrf.mxu0
    %1300 = vdwg.mxu0
    %v1301 = vadd.f32 %v1255, %v1296
    %v1302 = vxor.u32 %v1301, 2147483648
    %v1303 = vmul.f32 %v1302, 1.442695
    %v1304 = vpow.pop %v1303
    %v1305 = vadd.f32 %v1304, 1.0
    %v1306 = vrcp.pop %v1305
    %v1307 = vmul.f32 1.0, %v1306
    %v1308 = vtanh.pop %v1301
    %v1309 = vmul.f32 %v1307, %v1240
    %1311 = vrot.lane.b32.xlu0 %v1308, 32
    %v1312 = vpop.permute.xlu0 %1311
    %v1314 = vmul.f32 %v1307, %v1312
    %1316 = vrot.lane.b32.xlu0 %v1314, 32
    %v1317 = vpop.permute.xlu0 %1316
    %v1319 = vadd.f32 %v1309, %v1317
    %v1320 = vtanh.pop %v1319
    %1322 = vrot.lane.b32.xlu0 %v1320, 32
    %v1323 = vpop.permute.xlu0 %1322
    %v1325 = vmul.f32 %v1307, %v1323
    %v1326 = vpack.c.bf16 %v1325, %v1325
    %v1328 = vunpack.c.l.b16 %v1326
    %v1329 = vpack.c.b16 %v1328, %v1328
    %1330 = vrot.lane.b32.xlu0 %v1329, 64
    %v1331 = vpop.permute.xlu0 %1330
    %1333 = vst.msk [vmem:[%s523] sm:$0xf] %vm280, %v1331
    %v1334 = vld [vmem:[%s525] sm:$0xff]
    %1335 = vrot.lane.b32.xlu0 %v1326, 64
    %v1336 = vpop.permute.xlu0 %1335
    %v1338 = vsel %vm99, %v1336, 0
    %1340 = vmatprep.subr.bf16.mxu0 0
    %1341 = vmatpush1.bf16.msra.mxu0 0
    %1342 = vmatprep.subr.bf16.mxu0 0
    %1343 = vmatpush1.bf16.msra.mxu0 0
    %1344 = vmatprep.subr.bf16.mxu0 0
    %1345 = vmatpush1.bf16.msra.mxu0 0
    %1346 = vmatprep.subr.bf16.mxu0 0
    %1347 = vmatpush1.bf16.msra.mxu0 0
    %1348 = vmatprep.subr.bf16.mxu0 0
    %1349 = vmatpush1.bf16.msra.mxu0 0
    %1350 = vmatprep.subr.bf16.mxu0 0
    %1351 = vmatpush1.bf16.msra.mxu0 0
    %1352 = vmatprep.subr.bf16.mxu0 0
    %1353 = vmatpush1.bf16.msra.mxu0 %v1014
    %1354 = vmatprep.subr.bf16.mxu0 0
    %1355 = vmatpush1.bf16.msra.mxu0 %v1013
    %1356 = vmatprep.subr.bf16.mxu0 0
    %1357 = vmatpush2.bf16.msra.mxu0 0
    %1358 = vmatprep.subr.bf16.mxu0 0
    %1359 = vmatpush2.bf16.msra.mxu0 0
    %1360 = vmatprep.subr.bf16.mxu0 0
    %1361 = vmatpush2.bf16.msra.mxu0 0
    %1362 = vmatprep.subr.bf16.mxu0 0
    %1363 = vmatpush2.bf16.msra.mxu0 0
    %1364 = vmatprep.subr.bf16.mxu0 0
    %1365 = vmatpush2.bf16.msra.mxu0 0
    %1366 = vmatprep.subr.bf16.mxu0 0
    %1367 = vmatpush2.bf16.msra.mxu0 0
    %1368 = vmatprep.subr.bf16.mxu0 0
    %1369 = vmatpush2.bf16.msra.mxu0 0
    %1370 = vmatprep.subr.bf16.mxu0 0
    %1371 = vmatpush2.bf16.msra.mxu0 0
    %1372 = vmatprep.mubr.bf16.mxu0 0
    %1373 = vmatmul.mubr.bf16.gmra.mxu0 %v1338
    %v1374 = vpop.f32.mrf.mxu0
    %v1375 = vadd.f32 0.0, %v1374
    %v1376 = vpop.f32.mrf.mxu0
    %v1377 = vpop.f32.mrf.mxu0
    %v1378 = vpop.f32.mrf.mxu0
    %1379 = vdwg.mxu0
    %v1380 = vadd.f32 %v1334, %v1375
    %v1381 = vxor.u32 %v1380, 2147483648
    %v1382 = vmul.f32 %v1381, 1.442695
    %v1383 = vpow.pop %v1382
    %v1384 = vadd.f32 %v1383, 1.0
    %v1385 = vrcp.pop %v1384
    %v1386 = vmul.f32 1.0, %v1385
    %v1387 = vtanh.pop %v1380
    %v1388 = vmul.f32 %v1386, %v1319
    %1390 = vrot.lane.b32.xlu0 %v1387, 32
    %v1391 = vpop.permute.xlu0 %1390
    %v1393 = vmul.f32 %v1386, %v1391
    %1395 = vrot.lane.b32.xlu0 %v1393, 32
    %v1396 = vpop.permute.xlu0 %1395
    %v1398 = vadd.f32 %v1388, %v1396
    %v1399 = vtanh.pop %v1398
    %1401 = vrot.lane.b32.xlu0 %v1399, 32
    %v1402 = vpop.permute.xlu0 %1401
    %v1404 = vmul.f32 %v1386, %v1402
    %v1405 = vpack.c.bf16 %v1404, %v1404
    %v1407 = vunpack.c.l.b16 %v1405
    %v1408 = vpack.c.b16 %v1407, %v1407
    %1409 = vrot.lane.b32.xlu0 %v1408, 64
    %v1410 = vpop.permute.xlu0 %1409
    %1412 = vst.msk [vmem:[%s604] sm:$0xf] %vm280, %v1410
    %v1413 = vld [vmem:[%s606] sm:$0xff]
    %1414 = vrot.lane.b32.xlu0 %v1405, 64
    %v1415 = vpop.permute.xlu0 %1414
    %v1417 = vsel %vm99, %v1415, 0
    %1419 = vmatprep.subr.bf16.mxu0 0
    %1420 = vmatpush1.bf16.msra.mxu0 0
    %1421 = vmatprep.subr.bf16.mxu0 0
    %1422 = vmatpush1.bf16.msra.mxu0 0
    %1423 = vmatprep.subr.bf16.mxu0 0
    %1424 = vmatpush1.bf16.msra.mxu0 0
    %1425 = vmatprep.subr.bf16.mxu0 0
    %1426 = vmatpush1.bf16.msra.mxu0 0
    %1427 = vmatprep.subr.bf16.mxu0 0
    %1428 = vmatpush1.bf16.msra.mxu0 0
    %1429 = vmatprep.subr.bf16.mxu0 0
    %1430 = vmatpush1.bf16.msra.mxu0 0
    %1431 = vmatprep.subr.bf16.mxu0 0
    %1432 = vmatpush1.bf16.msra.mxu0 %v1014
    %1433 = vmatprep.subr.bf16.mxu0 0
    %1434 = vmatpush1.bf16.msra.mxu0 %v1013
    %1435 = vmatprep.subr.bf16.mxu0 0
    %1436 = vmatpush2.bf16.msra.mxu0 0
    %1437 = vmatprep.subr.bf16.mxu0 0
    %1438 = vmatpush2.bf16.msra.mxu0 0
    %1439 = vmatprep.subr.bf16.mxu0 0
    %1440 = vmatpush2.bf16.msra.mxu0 0
    %1441 = vmatprep.subr.bf16.mxu0 0
    %1442 = vmatpush2.bf16.msra.mxu0 0
    %1443 = vmatprep.subr.bf16.mxu0 0
    %1444 = vmatpush2.bf16.msra.mxu0 0
    %1445 = vmatprep.subr.bf16.mxu0 0
    %1446 = vmatpush2.bf16.msra.mxu0 0
    %1447 = vmatprep.subr.bf16.mxu0 0
    %1448 = vmatpush2.bf16.msra.mxu0 0
    %1449 = vmatprep.subr.bf16.mxu0 0
    %1450 = vmatpush2.bf16.msra.mxu0 0
    %1451 = vmatprep.mubr.bf16.mxu0 0
    %1452 = vmatmul.mubr.bf16.gmra.mxu0 %v1417
    %v1453 = vpop.f32.mrf.mxu0
    %v1454 = vadd.f32 0.0, %v1453
    %v1455 = vpop.f32.mrf.mxu0
    %v1456 = vpop.f32.mrf.mxu0
    %v1457 = vpop.f32.mrf.mxu0
    %1458 = vdwg.mxu0
    %v1459 = vadd.f32 %v1413, %v1454
    %v1460 = vxor.u32 %v1459, 2147483648
    %v1461 = vmul.f32 %v1460, 1.442695
    %v1462 = vpow.pop %v1461
    %v1463 = vadd.f32 %v1462, 1.0
    %v1464 = vrcp.pop %v1463
    %v1465 = vmul.f32 1.0, %v1464
    %v1466 = vtanh.pop %v1459
    %v1467 = vmul.f32 %v1465, %v1398
    %1469 = vrot.lane.b32.xlu0 %v1466, 32
    %v1470 = vpop.permute.xlu0 %1469
    %v1472 = vmul.f32 %v1465, %v1470
    %1474 = vrot.lane.b32.xlu0 %v1472, 32
    %v1475 = vpop.permute.xlu0 %1474
    %v1477 = vadd.f32 %v1467, %v1475
    %v1478 = vtanh.pop %v1477
    %1480 = vrot.lane.b32.xlu0 %v1478, 32
    %v1481 = vpop.permute.xlu0 %1480
    %v1483 = vmul.f32 %v1465, %v1481
    %v1484 = vpack.c.bf16 %v1483, %v1483
    %v1486 = vunpack.c.l.b16 %v1484
    %v1487 = vpack.c.b16 %v1486, %v1486
    %1488 = vrot.lane.b32.xlu0 %v1487, 64
    %v1489 = vpop.permute.xlu0 %1488
    %1491 = vst.msk [vmem:[%s685] sm:$0xf] %vm280, %v1489
    %v1492 = vld [vmem:[%s687] sm:$0xff]
    %1493 = vrot.lane.b32.xlu0 %v1484, 64
    %v1494 = vpop.permute.xlu0 %1493
    %v1496 = vsel %vm99, %v1494, 0
    %1498 = vmatprep.subr.bf16.mxu0 0
    %1499 = vmatpush1.bf16.msra.mxu0 0
    %1500 = vmatprep.subr.bf16.mxu0 0
    %1501 = vmatpush1.bf16.msra.mxu0 0
    %1502 = vmatprep.subr.bf16.mxu0 0
    %1503 = vmatpush1.bf16.msra.mxu0 0
    %1504 = vmatprep.subr.bf16.mxu0 0
    %1505 = vmatpush1.bf16.msra.mxu0 0
    %1506 = vmatprep.subr.bf16.mxu0 0
    %1507 = vmatpush1.bf16.msra.mxu0 0
    %1508 = vmatprep.subr.bf16.mxu0 0
    %1509 = vmatpush1.bf16.msra.mxu0 0
    %1510 = vmatprep.subr.bf16.mxu0 0
    %1511 = vmatpush1.bf16.msra.mxu0 %v1014
    %1512 = vmatprep.subr.bf16.mxu0 0
    %1513 = vmatpush1.bf16.msra.mxu0 %v1013
    %1514 = vmatprep.subr.bf16.mxu0 0
    %1515 = vmatpush2.bf16.msra.mxu0 0
    %1516 = vmatprep.subr.bf16.mxu0 0
    %1517 = vmatpush2.bf16.msra.mxu0 0
    %1518 = vmatprep.subr.bf16.mxu0 0
    %1519 = vmatpush2.bf16.msra.mxu0 0
    %1520 = vmatprep.subr.bf16.mxu0 0
    %1521 = vmatpush2.bf16.msra.mxu0 0
    %1522 = vmatprep.subr.bf16.mxu0 0
    %1523 = vmatpush2.bf16.msra.mxu0 0
    %1524 = vmatprep.subr.bf16.mxu0 0
    %1525 = vmatpush2.bf16.msra.mxu0 0
    %1526 = vmatprep.subr.bf16.mxu0 0
    %1527 = vmatpush2.bf16.msra.mxu0 0
    %1528 = vmatprep.subr.bf16.mxu0 0
    %1529 = vmatpush2.bf16.msra.mxu0 0
    %1530 = vmatprep.mubr.bf16.mxu0 0
    %1531 = vmatmul.mubr.bf16.gmra.mxu0 %v1496
    %v1532 = vpop.f32.mrf.mxu0
    %v1533 = vadd.f32 0.0, %v1532
    %v1534 = vpop.f32.mrf.mxu0
    %v1535 = vpop.f32.mrf.mxu0
    %v1536 = vpop.f32.mrf.mxu0
    %1537 = vdwg.mxu0
    %v1538 = vadd.f32 %v1492, %v1533
    %v1539 = vxor.u32 %v1538, 2147483648
    %v1540 = vmul.f32 %v1539, 1.442695
    %v1541 = vpow.pop %v1540
    %v1542 = vadd.f32 %v1541, 1.0
    %v1543 = vrcp.pop %v1542
    %v1544 = vmul.f32 1.0, %v1543
    %v1545 = vtanh.pop %v1538
    %v1546 = vmul.f32 %v1544, %v1477
    %1548 = vrot.lane.b32.xlu0 %v1545, 32
    %v1549 = vpop.permute.xlu0 %1548
    %v1551 = vmul.f32 %v1544, %v1549
    %1553 = vrot.lane.b32.xlu0 %v1551, 32
    %v1554 = vpop.permute.xlu0 %1553
    %v1556 = vadd.f32 %v1546, %v1554
    %v1557 = vtanh.pop %v1556
    %1559 = vrot.lane.b32.xlu0 %v1557, 32
    %v1560 = vpop.permute.xlu0 %1559
    %v1562 = vmul.f32 %v1544, %v1560
    %v1563 = vpack.c.bf16 %v1562, %v1562
    %v1565 = vunpack.c.l.b16 %v1563
    %v1566 = vpack.c.b16 %v1565, %v1565
    %1567 = vrot.lane.b32.xlu0 %v1566, 64
    %v1568 = vpop.permute.xlu0 %1567
    %1570 = vst.msk [vmem:[%s766] sm:$0xf] %vm280, %v1568
    %v1571 = vld [vmem:[%s768] sm:$0xff]
    %1572 = vrot.lane.b32.xlu0 %v1563, 64
    %v1573 = vpop.permute.xlu0 %1572
    %v1575 = vsel %vm99, %v1573, 0
    %1577 = vmatprep.subr.bf16.mxu0 0
    %1578 = vmatpush1.bf16.msra.mxu0 0
    %1579 = vmatprep.subr.bf16.mxu0 0
    %1580 = vmatpush1.bf16.msra.mxu0 0
    %1581 = vmatprep.subr.bf16.mxu0 0
    %1582 = vmatpush1.bf16.msra.mxu0 0
    %1583 = vmatprep.subr.bf16.mxu0 0
    %1584 = vmatpush1.bf16.msra.mxu0 0
    %1585 = vmatprep.subr.bf16.mxu0 0
    %1586 = vmatpush1.bf16.msra.mxu0 0
    %1587 = vmatprep.subr.bf16.mxu0 0
    %1588 = vmatpush1.bf16.msra.mxu0 0
    %1589 = vmatprep.subr.bf16.mxu0 0
    %1590 = vmatpush1.bf16.msra.mxu0 %v1014
    %1591 = vmatprep.subr.bf16.mxu0 0
    %1592 = vmatpush1.bf16.msra.mxu0 %v1013
    %1593 = vmatprep.subr.bf16.mxu0 0
    %1594 = vmatpush2.bf16.msra.mxu0 0
    %1595 = vmatprep.subr.bf16.mxu0 0
    %1596 = vmatpush2.bf16.msra.mxu0 0
    %1597 = vmatprep.subr.bf16.mxu0 0
    %1598 = vmatpush2.bf16.msra.mxu0 0
    %1599 = vmatprep.subr.bf16.mxu0 0
    %1600 = vmatpush2.bf16.msra.mxu0 0
    %1601 = vmatprep.subr.bf16.mxu0 0
    %1602 = vmatpush2.bf16.msra.mxu0 0
    %1603 = vmatprep.subr.bf16.mxu0 0
    %1604 = vmatpush2.bf16.msra.mxu0 0
    %1605 = vmatprep.subr.bf16.mxu0 0
    %1606 = vmatpush2.bf16.msra.mxu0 0
    %1607 = vmatprep.subr.bf16.mxu0 0
    %1608 = vmatpush2.bf16.msra.mxu0 0
    %1609 = vmatprep.mubr.bf16.mxu0 0
    %1610 = vmatmul.mubr.bf16.gmra.mxu0 %v1575
    %v1611 = vpop.f32.mrf.mxu0
    %v1612 = vadd.f32 0.0, %v1611
    %v1613 = vpop.f32.mrf.mxu0
    %v1614 = vpop.f32.mrf.mxu0
    %v1615 = vpop.f32.mrf.mxu0
    %1616 = vdwg.mxu0
    %v1617 = vadd.f32 %v1571, %v1612
    %v1618 = vxor.u32 %v1617, 2147483648
    %v1619 = vmul.f32 %v1618, 1.442695
    %v1620 = vpow.pop %v1619
    %v1621 = vadd.f32 %v1620, 1.0
    %v1622 = vrcp.pop %v1621
    %v1623 = vmul.f32 1.0, %v1622
    %v1624 = vtanh.pop %v1617
    %v1625 = vmul.f32 %v1623, %v1556
    %1627 = vrot.lane.b32.xlu0 %v1624, 32
    %v1628 = vpop.permute.xlu0 %1627
    %v1630 = vmul.f32 %v1623, %v1628
    %1632 = vrot.lane.b32.xlu0 %v1630, 32
    %v1633 = vpop.permute.xlu0 %1632
    %v1635 = vadd.f32 %v1625, %v1633
    %v1636 = vtanh.pop %v1635
    %1638 = vrot.lane.b32.xlu0 %v1636, 32
    %v1639 = vpop.permute.xlu0 %1638
    %v1641 = vmul.f32 %v1623, %v1639
    %v1642 = vpack.c.bf16 %v1641, %v1641
    %v1644 = vunpack.c.l.b16 %v1642
    %v1645 = vpack.c.b16 %v1644, %v1644
    %1646 = vrot.lane.b32.xlu0 %v1645, 64
    %v1647 = vpop.permute.xlu0 %1646
    %1649 = vst.msk [vmem:[%s847] sm:$0xf] %vm280, %v1647
    %1651 = vrot.lane.b32.xlu0 %v1641, 64
    %v1652 = vpop.permute.xlu0 %1651
    %s1654 = scalar_lea.vmem [#allocation4], 8
    %1655 = vst.msk [vmem:[%s1654] sm:$0xff] %vm99, %v1652
    %1657 = vrot.lane.b32.xlu0 %v1635, 96
    %v1658 = vpop.permute.xlu0 %1657
    %s1660 = scalar_lea.vmem [#allocation6], 8
    %1661 = vst.msk [vmem:[%s1660] sm:$0xff] %vm99, %v1658
    %v1662 = vld [vmem:[#allocation3] sm:$0xf]
    %v1663 = vld [vmem:[#allocation3 + $0x4] sm:$0xf]
    %v1664 = vld [vmem:[#allocation3 + $0x8] sm:$0xf]
    %v1665 = vld [vmem:[#allocation3 + $0xc] sm:$0xf]
    %v1666 = vld [vmem:[#allocation3 + $0x10] sm:$0xf]
    %v1667 = vld [vmem:[#allocation3 + $0x14] sm:$0xf]
    %v1668 = vld [vmem:[#allocation3 + $0x18] sm:$0xf]
    %v1669 = vld [vmem:[#allocation3 + $0x1c] sm:$0xf]
    %v1670 = vld [vmem:[%s9] sm:$0xf]
    %v1671 = vld [vmem:[%s9 + $0x4] sm:$0xf]
    %v1672 = vld [vmem:[%s9 + $0x8] sm:$0xf]
    %v1673 = vld [vmem:[%s9 + $0xc] sm:$0xf]
    %v1674 = vld [vmem:[%s10] sm:$0x1]
    %v1676 = vlaneseq
    %v1677 = vshrl.u32 %v1676, 7
    %v1678 = vsub.s32 0, %v1677
    %v1679 = vrot.slane %v1674, %v1678
    %v1689 = vunpack.c.l.b16 %v1662
    %v1690 = vunpack.c.l.b16 %v1663
    %v1691 = vunpack.c.l.b16 %v1664
    %v1692 = vunpack.c.l.b16 %v1665
    %v1693 = vunpack.c.l.b16 %v1666
    %v1694 = vunpack.c.l.b16 %v1667
    %v1695 = vunpack.c.l.b16 %v1668
    %v1696 = vunpack.c.l.b16 %v1669
    %v1697 = vpack.c.b16 %v1690, %v1689
    %v1698 = vpack.c.b16 %v1692, %v1691
    %v1699 = vpack.c.b16 %v1694, %v1693
    %v1700 = vpack.c.b16 %v1696, %v1695
    %v1705 = vunpack.c.l.b16 %v1670
    %v1706 = vunpack.c.l.b16 %v1671
    %v1707 = vunpack.c.l.b16 %v1672
    %v1708 = vunpack.c.l.b16 %v1673
    %v1709 = vpack.c.b16 %v1706, %v1705
    %v1710 = vpack.c.b16 %v1708, %v1707
    %v1714 = vsel %vm99, %v1697, 0
    %v1717 = vsel %vm99, %v1698, 0
    %v1720 = vsel %vm99, %v1699, 0
    %v1723 = vsel %vm99, %v1700, 0
    %1725 = vmatprep.subr.bf16.mxu0 0
    %1726 = vmatpush1.bf16.msra.mxu0 0
    %1727 = vmatprep.subr.bf16.mxu0 0
    %1728 = vmatpush1.bf16.msra.mxu0 0
    %1729 = vmatprep.subr.bf16.mxu0 0
    %1730 = vmatpush1.bf16.msra.mxu0 0
    %1731 = vmatprep.subr.bf16.mxu0 0
    %1732 = vmatpush1.bf16.msra.mxu0 0
    %1733 = vmatprep.subr.bf16.mxu0 0
    %1734 = vmatpush1.bf16.msra.mxu0 0
    %1735 = vmatprep.subr.bf16.mxu0 0
    %1736 = vmatpush1.bf16.msra.mxu0 0
    %1737 = vmatprep.subr.bf16.mxu0 0
    %1738 = vmatpush1.bf16.msra.mxu0 %v1710
    %1739 = vmatprep.subr.bf16.mxu0 0
    %1740 = vmatpush1.bf16.msra.mxu0 %v1709
    %1741 = vmatprep.subr.bf16.mxu0 0
    %1742 = vmatpush2.bf16.msra.mxu0 0
    %1743 = vmatprep.subr.bf16.mxu0 0
    %1744 = vmatpush2.bf16.msra.mxu0 0
    %1745 = vmatprep.subr.bf16.mxu0 0
    %1746 = vmatpush2.bf16.msra.mxu0 0
    %1747 = vmatprep.subr.bf16.mxu0 0
    %1748 = vmatpush2.bf16.msra.mxu0 0
    %1749 = vmatprep.subr.bf16.mxu0 0
    %1750 = vmatpush2.bf16.msra.mxu0 0
    %1751 = vmatprep.subr.bf16.mxu0 0
    %1752 = vmatpush2.bf16.msra.mxu0 0
    %1753 = vmatprep.subr.bf16.mxu0 0
    %1754 = vmatpush2.bf16.msra.mxu0 0
    %1755 = vmatprep.subr.bf16.mxu0 0
    %1756 = vmatpush2.bf16.msra.mxu0 0
    %1757 = vmatprep.mubr.bf16.mxu0 0
    %1758 = vmatmul.mubr.bf16.gmra.mxu0 %v1714
    %v1759 = vpop.f32.mrf.mxu0
    %v1760 = vadd.f32 %v1679, %v1759
    %v1761 = vpop.f32.mrf.mxu0
    %v1762 = vpop.f32.mrf.mxu0
    %v1763 = vadd.f32 %v1679, %v1762
    %v1764 = vpop.f32.mrf.mxu0
    %1765 = vmatprep.mubr.bf16.mxu0 0
    %1766 = vmatmul.mubr.bf16.gmra.mxu0 %v1717
    %v1767 = vpop.f32.mrf.mxu0
    %v1768 = vadd.f32 %v1679, %v1767
    %v1769 = vpop.f32.mrf.mxu0
    %v1770 = vpop.f32.mrf.mxu0
    %v1771 = vadd.f32 %v1679, %v1770
    %v1772 = vpop.f32.mrf.mxu0
    %1773 = vmatprep.mubr.bf16.mxu0 0
    %1774 = vmatmul.mubr.bf16.gmra.mxu0 %v1720
    %v1775 = vpop.f32.mrf.mxu0
    %v1776 = vadd.f32 %v1679, %v1775
    %v1777 = vpop.f32.mrf.mxu0
    %v1778 = vpop.f32.mrf.mxu0
    %v1779 = vadd.f32 %v1679, %v1778
    %v1780 = vpop.f32.mrf.mxu0
    %1781 = vmatprep.mubr.bf16.mxu0 0
    %1782 = vmatmul.mubr.bf16.gmra.mxu0 %v1723
    %v1783 = vpop.f32.mrf.mxu0
    %v1784 = vadd.f32 %v1679, %v1783
    %v1785 = vpop.f32.mrf.mxu0
    %v1786 = vpop.f32.mrf.mxu0
    %v1787 = vadd.f32 %v1679, %v1786
    %v1788 = vpop.f32.mrf.mxu0
    %1789 = vdwg.mxu0
    %1790 = vst [vmem:[%s11] sm:$0xff] %v1760
    %1791 = vst [vmem:[%s11 + $0x8] sm:$0xff] %v1763
    %1792 = vst [vmem:[%s11 + $0x10] sm:$0xff] %v1768
    %1793 = vst [vmem:[%s11 + $0x18] sm:$0xff] %v1771
    %1794 = vst [vmem:[%s11 + $0x20] sm:$0xff] %v1776
    %1795 = vst [vmem:[%s11 + $0x28] sm:$0xff] %v1779
    %1796 = vst [vmem:[%s11 + $0x30] sm:$0xff] %v1784
    %1797 = vst [vmem:[%s11 + $0x38] sm:$0xff] %v1787
    // Predicated region
    $region46: #{lstm_language_model.1} parent=1 // pred_check
      _
    $region47: #{lstm_language_model.1} parent=1 // pred_check_branch
      %1799 = sbr.rel (0) target = $region49
    $region48: #{lstm_language_model.1} parent=1 // pred_region
      _
    $region49: #{lstm_language_model.1} parent=1 // pred_fallthru
      _
    // Predicated region
    $region50: #{lstm_language_model.1} parent=1 // pred_check
      _
    $region51: #{lstm_language_model.1} parent=1 // pred_check_branch
      %1801 = sbr.rel (0) target = $region53
    $region52: #{lstm_language_model.1} parent=1 // pred_region
      %s1803 = ssub.s32 256, 256
      %1804 = vsyncadd [#allocation5], %s1803
      %s1805 = sshll.u32 [#allocation4], 4
      %s1806 = int_to_ptr.vmem [resolvable:$true] %s1805
      %1811 = dma.vmem_to_hbm [thread:$0]  %s1806, 256, %s12, [#allocation5], 128, 128, 8
    $region53: #{lstm_language_model.1} parent=1 // pred_fallthru
      _
    // Predicated region
    $region54: #{lstm_language_model.1} parent=1 // pred_check
      _
    $region55: #{lstm_language_model.1} parent=1 // pred_check_branch
      %1813 = sbr.rel (0) target = $region57
    $region56: #{lstm_language_model.1} parent=1 // pred_region
      %s1815 = ssub.s32 256, 256
      %1816 = vsyncadd [#allocation7], %s1815
      %s1817 = sshll.u32 [#allocation6], 4
      %s1818 = int_to_ptr.vmem [resolvable:$true] %s1817
      %1823 = dma.vmem_to_hbm [thread:$0]  %s1818, 256, %s13, [#allocation7], 128, 128, 8
    $region57: #{lstm_language_model.1} parent=1 // pred_fallthru
      _
    // Predicated region
    $region58: #{lstm_language_model.1} parent=1 // pred_check
      _
    $region59: #{lstm_language_model.1} parent=1 // pred_check_branch
      %1825 = sbr.rel (0) target = $region61
    $region60: #{lstm_language_model.1} parent=1 // pred_region
      _
    $region61: #{lstm_language_model.1} parent=1 // pred_fallthru
      _
    // Predicated region
    $region62: #{lstm_language_model.1} parent=1 // pred_check
      _
    $region63: #{lstm_language_model.1} parent=1 // pred_check_branch
      %1827 = sbr.rel (0) target = $region65
    $region64: #{lstm_language_model.1} parent=1 // pred_region
      %1828 = dma.done [#allocation5], 256
    $region65: #{lstm_language_model.1} parent=1 // pred_fallthru
      _
    // Predicated region
    $region66: #{lstm_language_model.1} parent=1 // pred_check
      _
    $region67: #{lstm_language_model.1} parent=1 // pred_check_branch
      %1830 = sbr.rel (0) target = $region69
    $region68: #{lstm_language_model.1} parent=1 // pred_region
      %1831 = dma.done [#allocation7], 256
    $region69: #{lstm_language_model.1} parent=1 // pred_fallthru
      _
    %1832 = vsyncpa [#allocation5], 1
    %1833 = vsyncpa [#allocation7], 1

</llo_original>
